<compile_context>
chip_gen: v7x
topology: tpu7x:2x2x1
jax: 0.10.0
libtpu: 0.0.40
codegen_flags: <defaults>
</compile_context>

<pallas_src>
import functools
import numpy as np
import jax
import jax.numpy as jnp
from jax import lax
from jax.experimental import pallas as pl
from jax.experimental.pallas import tpu as pltpu


def _resnet_block_kernel(
    # ---- inputs ----
    x_ref,                   # (1, Cin, N)    current batch element of x (f32)
    proj_ref,                # (1, Cout, 1)   precomputed Linear(noise_emb) (f32)
    gn1_g_ref, gn1_b_ref,    # (Cin, 1)       GroupNorm1 gamma / beta
    a1_ref,                  # (Cin, Cin)     in-group averaging matrix (1/(cpg*N))
    w1_ref, b1_ref,          # (Cout, 9*Cp_in) bf16, (Cout, 1) f32   conv1
    gn2_g_ref, gn2_b_ref,    # (Cout, 1)      GroupNorm2 gamma / beta
    a2_ref,                  # (Cout, Cout)
    w2_ref, b2_ref,          # (Cout, 9*Cp_out) bf16, (Cout, 1) f32  conv2
    res_w_ref, res_b_ref,    # (Cout, Cin) bf16, (Cout, 1) f32       1x1 residual conv
    mask_ref,                # (9, 1, N) f32  per-tap zero-pad validity masks
    # ---- outputs ----
    o_ref,                   # (1, Cout, N)
    # ---- scratch ----
    patch1_ref,              # (9*Cp_in,  N) f32  im2col buffer for conv1
    patch2_ref,              # (9*Cp_out, N) f32  im2col buffer for conv2
    *, eps: float, W: int, N: int,
):
    def group_norm(t, a_ref, gamma_ref, beta_ref):
        # Two-pass f32 statistics (lane reductions on the XLU, tiny per-group
        # combine on the MXU).  Kept in f32 for numerical safety.
        a = a_ref[...]
        mean = jnp.dot(a, jnp.sum(t, axis=1, keepdims=True),
                       preferred_element_type=jnp.float32)              # (C, 1)
        d = t - mean
        var = jnp.dot(a, jnp.sum(d * d, axis=1, keepdims=True),
                      preferred_element_type=jnp.float32)               # (C, 1)
        return d * lax.rsqrt(var + eps) * gamma_ref[...] + beta_ref[...]

    def swish(t):
        return t * jax.nn.sigmoid(t)

    def conv3x3(t, patch_ref, w_ref, bias_ref):
        # im2col: each 3x3 tap is a lane rotation (pltpu.roll) of the flattened
        # feature map, zeroed at the image border with a precomputed mask, and
        # stored into an 8-row-aligned slot of the scratch.  One fused bf16
        # GEMM then contracts over K = 9*Cpad input channels.
        c = t.shape[0]
        cpad = patch_ref.shape[0] // 9
        if c != cpad:
            # Padded channel rows never get written; zero them so the (zero)
            # padded weight columns multiply finite values.
            patch_ref[...] = jnp.zeros_like(patch_ref)
        for ky in range(3):
            for kx in range(3):
                tap = ky * 3 + kx
                d = (ky - 1) * W + (kx - 1)          # flattened source offset
                shifted = t if d == 0 else pltpu.roll(t, (-d) % N, axis=1)
                patch_ref[tap * cpad:tap * cpad + c, :] = shifted * mask_ref[tap]
        patch = patch_ref[...].astype(jnp.bfloat16)
        return jnp.dot(w_ref[...], patch,
                       preferred_element_type=jnp.float32) + bias_ref[...]

    x = x_ref[0]                                                         # (Cin, N) f32

    # ---- block1: GroupNorm -> Swish -> Conv3x3 (dropout=0 -> identity) ----
    h = conv3x3(swish(group_norm(x, a1_ref, gn1_g_ref, gn1_b_ref)),
                patch1_ref, w1_ref, b1_ref)

    # ---- FeatureWiseAffine (use_affine_level=False): h += Linear(emb) ----
    h = h + proj_ref[0]                                                  # (Cout, 1) bcast

    # ---- block2: GroupNorm -> Swish -> Conv3x3 ----
    h = conv3x3(swish(group_norm(h, a2_ref, gn2_g_ref, gn2_b_ref)),
                patch2_ref, w2_ref, b2_ref)

    # ---- 1x1 residual conv + final add ----
    res = jnp.dot(res_w_ref[...], x.astype(jnp.bfloat16),
                  preferred_element_type=jnp.float32) + res_b_ref[...]
    o_ref[0] = (h + res).astype(o_ref.dtype)


def resnet_block_pallas(x, time_emb, params, *, norm_groups):
    B, Cin, H, W = x.shape
    N = H * W
    Cout = params["conv1_w"].shape[0]

    def round8(c):
        return ((c + 7) // 8) * 8

    Cp_in, Cp_out = round8(Cin), round8(Cout)

    # ----- plain-JAX glue: layout conversions & small constant helpers -----
    x2 = x.reshape(B, Cin, N).astype(jnp.float32)

    # FeatureWiseAffine Linear hoisted out of the kernel: one tiny GEMM total.
    proj = (time_emb @ params["lin_w"].T + params["lin_b"]).astype(jnp.float32)
    proj = proj.reshape(B, Cout, 1)

    def col(v):                                      # (C,) -> (C, 1) f32
        return v.reshape(-1, 1).astype(jnp.float32)

    def conv_w_fused(w, cpad):                       # (Co,Ci,3,3) -> (Co, 9*cpad) bf16
        co, ci = w.shape[0], w.shape[1]
        wt = jnp.transpose(w, (2, 3, 0, 1)).reshape(9, co, ci)       # (9, Co, Ci)
        wt = jnp.pad(wt, ((0, 0), (0, 0), (0, cpad - ci)))           # zero pad channels
        return (jnp.transpose(wt, (1, 0, 2))
                .reshape(co, 9 * cpad).astype(jnp.bfloat16))

    def group_avg_matrix(c, groups):
        cpg = c // groups
        gid = np.arange(c) // cpg
        a = (gid[:, None] == gid[None, :]).astype(np.float32) / (cpg * N)
        return jnp.asarray(a)

    def tap_masks():
        # mask[tap, 0, y*W + x] = 1 iff the tap's shifted source is in-bounds.
        yy = np.arange(H)[:, None]
        xx = np.arange(W)[None, :]
        m = np.zeros((9, 1, N), np.float32)
        for ky in range(3):
            for kx in range(3):
                dy, dx = ky - 1, kx - 1
                valid = ((yy + dy >= 0) & (yy + dy < H)
                         & (xx + dx >= 0) & (xx + dx < W))
                m[ky * 3 + kx, 0] = valid.reshape(N).astype(np.float32)
        return jnp.asarray(m)

    inputs = (
        x2, proj,
        col(params["gn1_g"]), col(params["gn1_b"]),
        group_avg_matrix(Cin, norm_groups),
        conv_w_fused(params["conv1_w"], Cp_in), col(params["conv1_b"]),
        col(params["gn2_g"]), col(params["gn2_b"]),
        group_avg_matrix(Cout, norm_groups),
        conv_w_fused(params["conv2_w"], Cp_out), col(params["conv2_b"]),
        params["res_w"].astype(jnp.bfloat16), col(params["res_b"]),
        tap_masks(),
    )

    def full_spec(arr):
        nd = arr.ndim
        return pl.BlockSpec(arr.shape, lambda b, _nd=nd: (0,) * _nd)

    in_specs = (
        [pl.BlockSpec((1, Cin, N), lambda b: (b, 0, 0)),
         pl.BlockSpec((1, Cout, 1), lambda b: (b, 0, 0))]
        + [full_spec(a) for a in inputs[2:]]
    )

    kernel = functools.partial(_resnet_block_kernel, eps=1e-5, W=W, N=N)

    out = pl.pallas_call(
        kernel,
        out_shape=jax.ShapeDtypeStruct((B, Cout, N), jnp.float32),
        grid_spec=pltpu.PrefetchScalarGridSpec(
            num_scalar_prefetch=0,
            grid=(B,),
            in_specs=in_specs,
            out_specs=pl.BlockSpec((1, Cout, N), lambda b: (b, 0, 0)),
            scratch_shapes=[pltpu.VMEM((9 * Cp_in, N), jnp.float32),
                            pltpu.VMEM((9 * Cp_out, N), jnp.float32)]),
        compiler_params=pltpu.CompilerParams(
            dimension_semantics=("parallel",)),
    )(*inputs)
    return out.reshape(B, Cout, H, W)


# ----------------------- plain-JAX reference (for checking) -----------------------
def resnet_block_ref(x, time_emb, params, *, norm_groups):
    def group_norm(t, gamma, beta, groups, eps=1e-5):
        B, C, H, W = t.shape
        tg = t.reshape(B, groups, -1)
        m = tg.mean(axis=-1, keepdims=True)
        v = ((tg - m) ** 2).mean(axis=-1, keepdims=True)
        tn = ((tg - m) / jnp.sqrt(v + eps)).reshape(B, C, H, W)
        return tn * gamma.reshape(1, C, 1, 1) + beta.reshape(1, C, 1, 1)

    def swish(t):
        return t * jax.nn.sigmoid(t)

    def conv3x3(t, w, b):
        out = lax.conv_general_dilated(
            t, w, window_strides=(1, 1), padding="SAME",
            dimension_numbers=("NCHW", "OIHW", "NCHW"))
        return out + b.reshape(1, -1, 1, 1)

    B = x.shape[0]
    h = conv3x3(swish(group_norm(x, params["gn1_g"], params["gn1_b"], norm_groups)),
                params["conv1_w"], params["conv1_b"])
    proj = time_emb @ params["lin_w"].T + params["lin_b"]
    h = h + proj.reshape(B, -1, 1, 1)
    h = conv3x3(swish(group_norm(h, params["gn2_g"], params["gn2_b"], norm_groups)),
                params["conv2_w"], params["conv2_b"])
    res = jnp.einsum("oc,bchw->bohw", params["res_w"], x) \
        + params["res_b"].reshape(1, -1, 1, 1)
    return h + res


if __name__ == "__main__":
    # Small shapes consistent with ResnetBlock(dim=4, dim_out=8,
    # noise_level_emb_dim=32, norm_groups=2), input x: NCHW.
    B, Cin, Cout, H, W, E = 2, 4, 8, 16, 16, 32
    norm_groups = 2

    key = jax.random.PRNGKey(0)
    ks = jax.random.split(key, 14)
    x = jax.random.normal(ks[0], (B, Cin, H, W), jnp.float32)
    time_emb = jax.random.normal(ks[1], (B, E), jnp.float32)

    params = {
        "gn1_g": 1.0 + 0.1 * jax.random.normal(ks[2], (Cin,), jnp.float32),
        "gn1_b": 0.1 * jax.random.normal(ks[3], (Cin,), jnp.float32),
        "conv1_w": 0.2 * jax.random.normal(ks[4], (Cout, Cin, 3, 3), jnp.float32),
        "conv1_b": 0.05 * jax.random.normal(ks[5], (Cout,), jnp.float32),
        "lin_w": 0.2 * jax.random.normal(ks[6], (Cout, E), jnp.float32),
        "lin_b": 0.05 * jax.random.normal(ks[7], (Cout,), jnp.float32),
        "gn2_g": 1.0 + 0.1 * jax.random.normal(ks[8], (Cout,), jnp.float32),
        "gn2_b": 0.1 * jax.random.normal(ks[9], (Cout,), jnp.float32),
        "conv2_w": 0.2 * jax.random.normal(ks[10], (Cout, Cout, 3, 3), jnp.float32),
        "conv2_b": 0.05 * jax.random.normal(ks[11], (Cout,), jnp.float32),
        "res_w": 0.3 * jax.random.normal(ks[12], (Cout, Cin), jnp.float32),  # 1x1 conv
        "res_b": 0.05 * jax.random.normal(ks[13], (Cout,), jnp.float32),
    }

    out = resnet_block_pallas(x, time_emb, params, norm_groups=norm_groups)
    out = jax.block_until_ready(out)

    ref = resnet_block_ref(x, time_emb, params, norm_groups=norm_groups)
    assert out.shape == (B, Cout, H, W)
    max_diff = float(jnp.max(jnp.abs(out - ref)))
    mean_diff = float(jnp.mean(jnp.abs(out - ref)))
    # bf16 MXU operands with f32 accumulation -> allow bf16-scale deviation.
    assert max_diff < 1e-1, f"max abs diff too large: {max_diff}"
    assert mean_diff < 1e-2, f"mean abs diff too large: {mean_diff}"
    print("KERNEL_OK")
</pallas_src>

<mosaic_0001>
module attributes {stable_mosaic.version = 11 : i64} {
  func.func @_resnet_block_kernel(%arg0: i32, %arg1: memref<1x4x256xf32, #tpu.memory_space<vmem>>, %arg2: memref<1x8x1xf32, #tpu.memory_space<vmem>>, %arg3: memref<4x1xf32, #tpu.memory_space<vmem>>, %arg4: memref<4x1xf32, #tpu.memory_space<vmem>>, %arg5: memref<4x4xf32, #tpu.memory_space<vmem>>, %arg6: memref<8x72xbf16, #tpu.memory_space<vmem>>, %arg7: memref<8x1xf32, #tpu.memory_space<vmem>>, %arg8: memref<8x1xf32, #tpu.memory_space<vmem>>, %arg9: memref<8x1xf32, #tpu.memory_space<vmem>>, %arg10: memref<8x8xf32, #tpu.memory_space<vmem>>, %arg11: memref<8x72xbf16, #tpu.memory_space<vmem>>, %arg12: memref<8x1xf32, #tpu.memory_space<vmem>>, %arg13: memref<8x4xbf16, #tpu.memory_space<vmem>>, %arg14: memref<8x1xf32, #tpu.memory_space<vmem>>, %arg15: memref<9x1x256xf32, #tpu.memory_space<vmem>>, %arg16: memref<1x8x256xf32, #tpu.memory_space<vmem>>, %arg17: memref<72x256xf32, #tpu.memory_space<vmem>>, %arg18: memref<72x256xf32, #tpu.memory_space<vmem>>) attributes {dimension_semantics = [#tpu.dimension_semantics<parallel>], iteration_bounds = array<i64: 2>, scalar_prefetch = 0 : i64, scratch_operands = 2 : i64, tpu.core_type = #tpu.core_type<tc>, window_params = [{transform_indices = @transform_0, window_bounds = array<i64: 1, 4, 256>}, {transform_indices = @transform_1, window_bounds = array<i64: 1, 8, 1>}, {pipeline_mode = #tpu.pipeline_mode<synchronous>, transform_indices = @transform_2, window_bounds = array<i64: 4, 1>}, {pipeline_mode = #tpu.pipeline_mode<synchronous>, transform_indices = @transform_3, window_bounds = array<i64: 4, 1>}, {pipeline_mode = #tpu.pipeline_mode<synchronous>, transform_indices = @transform_4, window_bounds = array<i64: 4, 4>}, {pipeline_mode = #tpu.pipeline_mode<synchronous>, transform_indices = @transform_5, window_bounds = array<i64: 8, 72>}, {pipeline_mode = #tpu.pipeline_mode<synchronous>, transform_indices = @transform_6, window_bounds = array<i64: 8, 1>}, {pipeline_mode = #tpu.pipeline_mode<synchronous>, transform_indices = @transform_7, window_bounds = array<i64: 8, 1>}, {pipeline_mode = #tpu.pipeline_mode<synchronous>, transform_indices = @transform_8, window_bounds = array<i64: 8, 1>}, {pipeline_mode = #tpu.pipeline_mode<synchronous>, transform_indices = @transform_9, window_bounds = array<i64: 8, 8>}, {pipeline_mode = #tpu.pipeline_mode<synchronous>, transform_indices = @transform_10, window_bounds = array<i64: 8, 72>}, {pipeline_mode = #tpu.pipeline_mode<synchronous>, transform_indices = @transform_11, window_bounds = array<i64: 8, 1>}, {pipeline_mode = #tpu.pipeline_mode<synchronous>, transform_indices = @transform_12, window_bounds = array<i64: 8, 4>}, {pipeline_mode = #tpu.pipeline_mode<synchronous>, transform_indices = @transform_13, window_bounds = array<i64: 8, 1>}, {pipeline_mode = #tpu.pipeline_mode<synchronous>, transform_indices = @transform_14, window_bounds = array<i64: 9, 1, 256>}, {transform_indices = @transform_15, window_bounds = array<i64: 1, 8, 256>}]} {
    %c0 = arith.constant 0 : index
    %c0_0 = arith.constant 0 : index
    %c0_1 = arith.constant 0 : index
    %0 = vector.load %arg1[%c0, %c0_0, %c0_1] : memref<1x4x256xf32, #tpu.memory_space<vmem>>, vector<1x4x256xf32>
    %1 = vector.shape_cast %0 : vector<1x4x256xf32> to vector<4x256xf32>
    %c0_2 = arith.constant 0 : index
    %c0_3 = arith.constant 0 : index
    %2 = vector.load %arg5[%c0_2, %c0_3] : memref<4x4xf32, #tpu.memory_space<vmem>>, vector<4x4xf32>
    %cst = arith.constant dense<0.000000e+00> : vector<4xf32>
    %3 = vector.multi_reduction <add>, %1, %cst [1] : vector<4x256xf32> to vector<4xf32>
    %4 = vector.shape_cast %3 : vector<4xf32> to vector<4x1xf32>
    %cst_4 = arith.constant dense<0.000000e+00> : vector<4x1xf32>
    %5 = tpu.matmul %2, %4, %cst_4 {dimension_numbers = #tpu.dot_dimension_numbers<[1], [0], [0], [1], [0, 0, 1, 1], [], []>} : vector<4x4xf32>, vector<4x1xf32>, vector<4x1xf32> -> vector<4x1xf32>
    %6 = vector.broadcast %5 : vector<4x1xf32> to vector<4x256xf32>
    %7 = arith.subf %1, %6 : vector<4x256xf32>
    %8 = arith.mulf %7, %7 : vector<4x256xf32>
    %cst_5 = arith.constant dense<0.000000e+00> : vector<4xf32>
    %9 = vector.multi_reduction <add>, %8, %cst_5 [1] : vector<4x256xf32> to vector<4xf32>
    %10 = vector.shape_cast %9 : vector<4xf32> to vector<4x1xf32>
    %cst_6 = arith.constant dense<0.000000e+00> : vector<4x1xf32>
    %11 = tpu.matmul %2, %10, %cst_6 {dimension_numbers = #tpu.dot_dimension_numbers<[1], [0], [0], [1], [0, 0, 1, 1], [], []>} : vector<4x4xf32>, vector<4x1xf32>, vector<4x1xf32> -> vector<4x1xf32>
    %cst_7 = arith.constant 9.99999974E-6 : f32
    %12 = vector.broadcast %cst_7 : f32 to vector<4x1xf32>
    %13 = arith.addf %11, %12 : vector<4x1xf32>
    %14 = math.rsqrt %13 : vector<4x1xf32>
    %15 = vector.broadcast %14 : vector<4x1xf32> to vector<4x256xf32>
    %16 = arith.mulf %7, %15 : vector<4x256xf32>
    %c0_8 = arith.constant 0 : index
    %c0_9 = arith.constant 0 : index
    %17 = vector.load %arg3[%c0_8, %c0_9] : memref<4x1xf32, #tpu.memory_space<vmem>>, vector<4x1xf32>
    %18 = vector.broadcast %17 : vector<4x1xf32> to vector<4x256xf32>
    %19 = arith.mulf %16, %18 : vector<4x256xf32>
    %c0_10 = arith.constant 0 : index
    %c0_11 = arith.constant 0 : index
    %20 = vector.load %arg4[%c0_10, %c0_11] : memref<4x1xf32, #tpu.memory_space<vmem>>, vector<4x1xf32>
    %21 = vector.broadcast %20 : vector<4x1xf32> to vector<4x256xf32>
    %22 = arith.addf %19, %21 : vector<4x256xf32>
    %23 = arith.negf %22 : vector<4x256xf32>
    %24 = math.exp %23 : vector<4x256xf32>
    %cst_12 = arith.constant 1.000000e+00 : f32
    %25 = vector.broadcast %cst_12 : f32 to vector<4x256xf32>
    %26 = arith.addf %25, %24 : vector<4x256xf32>
    %27 = arith.divf %25, %26 : vector<4x256xf32>
    %28 = arith.mulf %22, %27 : vector<4x256xf32>
    %cst_13 = arith.constant 0.000000e+00 : f32
    %29 = vector.broadcast %cst_13 : f32 to vector<72x256xf32>
    %c0_14 = arith.constant 0 : index
    %c0_15 = arith.constant 0 : index
    %30 = vector.load %arg17[%c0_14, %c0_15] : memref<72x256xf32, #tpu.memory_space<vmem>>, vector<72x256xf32>
    tpu.vector_store %arg17[%c0_14, %c0_15], %29 {strides = array<i32>} : memref<72x256xf32, #tpu.memory_space<vmem>>, vector<72x256xf32>,
    %c17_i32 = arith.constant 17 : i32
    %31 = tpu.dynamic_rotate %28 by %c17_i32 dim 1 : vector<4x256xf32>, i32 -> vector<4x256xf32>
    %c0_16 = arith.constant 0 : index
    %c0_17 = arith.constant 0 : index
    %c0_18 = arith.constant 0 : index
    %32 = vector.load %arg15[%c0_16, %c0_17, %c0_18] : memref<9x1x256xf32, #tpu.memory_space<vmem>>, vector<1x1x256xf32>
    %33 = vector.shape_cast %32 : vector<1x1x256xf32> to vector<1x256xf32>
    %34 = vector.broadcast %33 : vector<1x256xf32> to vector<4x256xf32>
    %35 = arith.mulf %31, %34 : vector<4x256xf32>
    %c0_19 = arith.constant 0 : index
    %c0_20 = arith.constant 0 : index
    %36 = vector.load %arg17[%c0_19, %c0_20] : memref<72x256xf32, #tpu.memory_space<vmem>>, vector<4x256xf32>
    tpu.vector_store %arg17[%c0_19, %c0_20], %35 {strides = array<i32>} : memref<72x256xf32, #tpu.memory_space<vmem>>, vector<4x256xf32>,
    %c16_i32 = arith.constant 16 : i32
    %37 = tpu.dynamic_rotate %28 by %c16_i32 dim 1 : vector<4x256xf32>, i32 -> vector<4x256xf32>
    %c1 = arith.constant 1 : index
    %c0_21 = arith.constant 0 : index
    %c0_22 = arith.constant 0 : index
    %38 = vector.load %arg15[%c1, %c0_21, %c0_22] : memref<9x1x256xf32, #tpu.memory_space<vmem>>, vector<1x1x256xf32>
    %39 = vector.shape_cast %38 : vector<1x1x256xf32> to vector<1x256xf32>
    %40 = vector.broadcast %39 : vector<1x256xf32> to vector<4x256xf32>
    %41 = arith.mulf %37, %40 : vector<4x256xf32>
    %c8 = arith.constant 8 : index
    %c0_23 = arith.constant 0 : index
    %42 = vector.load %arg17[%c8, %c0_23] : memref<72x256xf32, #tpu.memory_space<vmem>>, vector<4x256xf32>
    tpu.vector_store %arg17[%c8, %c0_23], %41 {strides = array<i32>} : memref<72x256xf32, #tpu.memory_space<vmem>>, vector<4x256xf32>,
    %c15_i32 = arith.constant 15 : i32
    %43 = tpu.dynamic_rotate %28 by %c15_i32 dim 1 : vector<4x256xf32>, i32 -> vector<4x256xf32>
    %c2 = arith.constant 2 : index
    %c0_24 = arith.constant 0 : index
    %c0_25 = arith.constant 0 : index
    %44 = vector.load %arg15[%c2, %c0_24, %c0_25] : memref<9x1x256xf32, #tpu.memory_space<vmem>>, vector<1x1x256xf32>
    %45 = vector.shape_cast %44 : vector<1x1x256xf32> to vector<1x256xf32>
    %46 = vector.broadcast %45 : vector<1x256xf32> to vector<4x256xf32>
    %47 = arith.mulf %43, %46 : vector<4x256xf32>
    %c16 = arith.constant 16 : index
    %c0_26 = arith.constant 0 : index
    %48 = vector.load %arg17[%c16, %c0_26] : memref<72x256xf32, #tpu.memory_space<vmem>>, vector<4x256xf32>
    tpu.vector_store %arg17[%c16, %c0_26], %47 {strides = array<i32>} : memref<72x256xf32, #tpu.memory_space<vmem>>, vector<4x256xf32>,
    %c1_i32 = arith.constant 1 : i32
    %49 = tpu.dynamic_rotate %28 by %c1_i32 dim 1 : vector<4x256xf32>, i32 -> vector<4x256xf32>
    %c3 = arith.constant 3 : index
    %c0_27 = arith.constant 0 : index
    %c0_28 = arith.constant 0 : index
    %50 = vector.load %arg15[%c3, %c0_27, %c0_28] : memref<9x1x256xf32, #tpu.memory_space<vmem>>, vector<1x1x256xf32>
    %51 = vector.shape_cast %50 : vector<1x1x256xf32> to vector<1x256xf32>
    %52 = vector.broadcast %51 : vector<1x256xf32> to vector<4x256xf32>
    %53 = arith.mulf %49, %52 : vector<4x256xf32>
    %c24 = arith.constant 24 : index
    %c0_29 = arith.constant 0 : index
    %54 = vector.load %arg17[%c24, %c0_29] : memref<72x256xf32, #tpu.memory_space<vmem>>, vector<4x256xf32>
    tpu.vector_store %arg17[%c24, %c0_29], %53 {strides = array<i32>} : memref<72x256xf32, #tpu.memory_space<vmem>>, vector<4x256xf32>,
    %c4 = arith.constant 4 : index
    %c0_30 = arith.constant 0 : index
    %c0_31 = arith.constant 0 : index
    %55 = vector.load %arg15[%c4, %c0_30, %c0_31] : memref<9x1x256xf32, #tpu.memory_space<vmem>>, vector<1x1x256xf32>
    %56 = vector.shape_cast %55 : vector<1x1x256xf32> to vector<1x256xf32>
    %57 = vector.broadcast %56 : vector<1x256xf32> to vector<4x256xf32>
    %58 = arith.mulf %28, %57 : vector<4x256xf32>
    %c32 = arith.constant 32 : index
    %c0_32 = arith.constant 0 : index
    %59 = vector.load %arg17[%c32, %c0_32] : memref<72x256xf32, #tpu.memory_space<vmem>>, vector<4x256xf32>
    tpu.vector_store %arg17[%c32, %c0_32], %58 {strides = array<i32>} : memref<72x256xf32, #tpu.memory_space<vmem>>, vector<4x256xf32>,
    %c255_i32 = arith.constant 255 : i32
    %60 = tpu.dynamic_rotate %28 by %c255_i32 dim 1 : vector<4x256xf32>, i32 -> vector<4x256xf32>
    %c5 = arith.constant 5 : index
    %c0_33 = arith.constant 0 : index
    %c0_34 = arith.constant 0 : index
    %61 = vector.load %arg15[%c5, %c0_33, %c0_34] : memref<9x1x256xf32, #tpu.memory_space<vmem>>, vector<1x1x256xf32>
    %62 = vector.shape_cast %61 : vector<1x1x256xf32> to vector<1x256xf32>
    %63 = vector.broadcast %62 : vector<1x256xf32> to vector<4x256xf32>
    %64 = arith.mulf %60, %63 : vector<4x256xf32>
    %c40 = arith.constant 40 : index
    %c0_35 = arith.constant 0 : index
    %65 = vector.load %arg17[%c40, %c0_35] : memref<72x256xf32, #tpu.memory_space<vmem>>, vector<4x256xf32>
    tpu.vector_store %arg17[%c40, %c0_35], %64 {strides = array<i32>} : memref<72x256xf32, #tpu.memory_space<vmem>>, vector<4x256xf32>,
    %c241_i32 = arith.constant 241 : i32
    %66 = tpu.dynamic_rotate %28 by %c241_i32 dim 1 : vector<4x256xf32>, i32 -> vector<4x256xf32>
    %c6 = arith.constant 6 : index
    %c0_36 = arith.constant 0 : index
    %c0_37 = arith.constant 0 : index
    %67 = vector.load %arg15[%c6, %c0_36, %c0_37] : memref<9x1x256xf32, #tpu.memory_space<vmem>>, vector<1x1x256xf32>
    %68 = vector.shape_cast %67 : vector<1x1x256xf32> to vector<1x256xf32>
    %69 = vector.broadcast %68 : vector<1x256xf32> to vector<4x256xf32>
    %70 = arith.mulf %66, %69 : vector<4x256xf32>
    %c48 = arith.constant 48 : index
    %c0_38 = arith.constant 0 : index
    %71 = vector.load %arg17[%c48, %c0_38] : memref<72x256xf32, #tpu.memory_space<vmem>>, vector<4x256xf32>
    tpu.vector_store %arg17[%c48, %c0_38], %70 {strides = array<i32>} : memref<72x256xf32, #tpu.memory_space<vmem>>, vector<4x256xf32>,
    %c240_i32 = arith.constant 240 : i32
    %72 = tpu.dynamic_rotate %28 by %c240_i32 dim 1 : vector<4x256xf32>, i32 -> vector<4x256xf32>
    %c7 = arith.constant 7 : index
    %c0_39 = arith.constant 0 : index
    %c0_40 = arith.constant 0 : index
    %73 = vector.load %arg15[%c7, %c0_39, %c0_40] : memref<9x1x256xf32, #tpu.memory_space<vmem>>, vector<1x1x256xf32>
    %74 = vector.shape_cast %73 : vector<1x1x256xf32> to vector<1x256xf32>
    %75 = vector.broadcast %74 : vector<1x256xf32> to vector<4x256xf32>
    %76 = arith.mulf %72, %75 : vector<4x256xf32>
    %c56 = arith.constant 56 : index
    %c0_41 = arith.constant 0 : index
    %77 = vector.load %arg17[%c56, %c0_41] : memref<72x256xf32, #tpu.memory_space<vmem>>, vector<4x256xf32>
    tpu.vector_store %arg17[%c56, %c0_41], %76 {strides = array<i32>} : memref<72x256xf32, #tpu.memory_space<vmem>>, vector<4x256xf32>,
    %c239_i32 = arith.constant 239 : i32
    %78 = tpu.dynamic_rotate %28 by %c239_i32 dim 1 : vector<4x256xf32>, i32 -> vector<4x256xf32>
    %c8_42 = arith.constant 8 : index
    %c0_43 = arith.constant 0 : index
    %c0_44 = arith.constant 0 : index
    %79 = vector.load %arg15[%c8_42, %c0_43, %c0_44] : memref<9x1x256xf32, #tpu.memory_space<vmem>>, vector<1x1x256xf32>
    %80 = vector.shape_cast %79 : vector<1x1x256xf32> to vector<1x256xf32>
    %81 = vector.broadcast %80 : vector<1x256xf32> to vector<4x256xf32>
    %82 = arith.mulf %78, %81 : vector<4x256xf32>
    %c64 = arith.constant 64 : index
    %c0_45 = arith.constant 0 : index
    %83 = vector.load %arg17[%c64, %c0_45] : memref<72x256xf32, #tpu.memory_space<vmem>>, vector<4x256xf32>
    tpu.vector_store %arg17[%c64, %c0_45], %82 {strides = array<i32>} : memref<72x256xf32, #tpu.memory_space<vmem>>, vector<4x256xf32>,
    %c0_46 = arith.constant 0 : index
    %c0_47 = arith.constant 0 : index
    %84 = vector.load %arg17[%c0_46, %c0_47] : memref<72x256xf32, #tpu.memory_space<vmem>>, vector<72x256xf32>
    %85 = arith.truncf %84 : vector<72x256xf32> to vector<72x256xbf16>
    %c0_48 = arith.constant 0 : index
    %c0_49 = arith.constant 0 : index
    %86 = vector.load %arg6[%c0_48, %c0_49] : memref<8x72xbf16, #tpu.memory_space<vmem>>, vector<8x72xbf16>
    %cst_50 = arith.constant dense<0.000000e+00> : vector<8x256xf32>
    %87 = tpu.matmul %86, %85, %cst_50 {dimension_numbers = #tpu.dot_dimension_numbers<[1], [0], [0], [1], [0, 0, 1, 1], [], []>} : vector<8x72xbf16>, vector<72x256xbf16>, vector<8x256xf32> -> vector<8x256xf32>
    %c0_51 = arith.constant 0 : index
    %c0_52 = arith.constant 0 : index
    %88 = vector.load %arg7[%c0_51, %c0_52] : memref<8x1xf32, #tpu.memory_space<vmem>>, vector<8x1xf32>
    %89 = vector.broadcast %88 : vector<8x1xf32> to vector<8x256xf32>
    %90 = arith.addf %87, %89 : vector<8x256xf32>
    %c0_53 = arith.constant 0 : index
    %c0_54 = arith.constant 0 : index
    %c0_55 = arith.constant 0 : index
    %91 = vector.load %arg2[%c0_53, %c0_54, %c0_55] : memref<1x8x1xf32, #tpu.memory_space<vmem>>, vector<1x8x1xf32>
    %92 = vector.shape_cast %91 : vector<1x8x1xf32> to vector<8x1xf32>
    %93 = vector.broadcast %92 : vector<8x1xf32> to vector<8x256xf32>
    %94 = arith.addf %90, %93 : vector<8x256xf32>
    %c0_56 = arith.constant 0 : index
    %c0_57 = arith.constant 0 : index
    %95 = vector.load %arg10[%c0_56, %c0_57] : memref<8x8xf32, #tpu.memory_space<vmem>>, vector<8x8xf32>
    %cst_58 = arith.constant dense<0.000000e+00> : vector<8xf32>
    %96 = vector.multi_reduction <add>, %94, %cst_58 [1] : vector<8x256xf32> to vector<8xf32>
    %97 = vector.shape_cast %96 : vector<8xf32> to vector<8x1xf32>
    %cst_59 = arith.constant dense<0.000000e+00> : vector<8x1xf32>
    %98 = tpu.matmul %95, %97, %cst_59 {dimension_numbers = #tpu.dot_dimension_numbers<[1], [0], [0], [1], [0, 0, 1, 1], [], []>} : vector<8x8xf32>, vector<8x1xf32>, vector<8x1xf32> -> vector<8x1xf32>
    %99 = vector.broadcast %98 : vector<8x1xf32> to vector<8x256xf32>
    %100 = arith.subf %94, %99 : vector<8x256xf32>
    %101 = arith.mulf %100, %100 : vector<8x256xf32>
    %cst_60 = arith.constant dense<0.000000e+00> : vector<8xf32>
    %102 = vector.multi_reduction <add>, %101, %cst_60 [1] : vector<8x256xf32> to vector<8xf32>
    %103 = vector.shape_cast %102 : vector<8xf32> to vector<8x1xf32>
    %cst_61 = arith.constant dense<0.000000e+00> : vector<8x1xf32>
    %104 = tpu.matmul %95, %103, %cst_61 {dimension_numbers = #tpu.dot_dimension_numbers<[1], [0], [0], [1], [0, 0, 1, 1], [], []>} : vector<8x8xf32>, vector<8x1xf32>, vector<8x1xf32> -> vector<8x1xf32>
    %cst_62 = arith.constant 9.99999974E-6 : f32
    %105 = vector.broadcast %cst_62 : f32 to vector<8x1xf32>
    %106 = arith.addf %104, %105 : vector<8x1xf32>
    %107 = math.rsqrt %106 : vector<8x1xf32>
    %108 = vector.broadcast %107 : vector<8x1xf32> to vector<8x256xf32>
    %109 = arith.mulf %100, %108 : vector<8x256xf32>
    %c0_63 = arith.constant 0 : index
    %c0_64 = arith.constant 0 : index
    %110 = vector.load %arg8[%c0_63, %c0_64] : memref<8x1xf32, #tpu.memory_space<vmem>>, vector<8x1xf32>
    %111 = vector.broadcast %110 : vector<8x1xf32> to vector<8x256xf32>
    %112 = arith.mulf %109, %111 : vector<8x256xf32>
    %c0_65 = arith.constant 0 : index
    %c0_66 = arith.constant 0 : index
    %113 = vector.load %arg9[%c0_65, %c0_66] : memref<8x1xf32, #tpu.memory_space<vmem>>, vector<8x1xf32>
    %114 = vector.broadcast %113 : vector<8x1xf32> to vector<8x256xf32>
    %115 = arith.addf %112, %114 : vector<8x256xf32>
    %116 = arith.negf %115 : vector<8x256xf32>
    %117 = math.exp %116 : vector<8x256xf32>
    %cst_67 = arith.constant 1.000000e+00 : f32
    %118 = vector.broadcast %cst_67 : f32 to vector<8x256xf32>
    %119 = arith.addf %118, %117 : vector<8x256xf32>
    %120 = arith.divf %118, %119 : vector<8x256xf32>
    %121 = arith.mulf %115, %120 : vector<8x256xf32>
    %c17_i32_68 = arith.constant 17 : i32
    %122 = tpu.dynamic_rotate %121 by %c17_i32_68 dim 1 : vector<8x256xf32>, i32 -> vector<8x256xf32>
    %c0_69 = arith.constant 0 : index
    %c0_70 = arith.constant 0 : index
    %c0_71 = arith.constant 0 : index
    %123 = vector.load %arg15[%c0_69, %c0_70, %c0_71] : memref<9x1x256xf32, #tpu.memory_space<vmem>>, vector<1x1x256xf32>
    %124 = vector.shape_cast %123 : vector<1x1x256xf32> to vector<1x256xf32>
    %125 = vector.broadcast %124 : vector<1x256xf32> to vector<8x256xf32>
    %126 = arith.mulf %122, %125 : vector<8x256xf32>
    %c0_72 = arith.constant 0 : index
    %c0_73 = arith.constant 0 : index
    %127 = vector.load %arg18[%c0_72, %c0_73] : memref<72x256xf32, #tpu.memory_space<vmem>>, vector<8x256xf32>
    tpu.vector_store %arg18[%c0_72, %c0_73], %126 {strides = array<i32>} : memref<72x256xf32, #tpu.memory_space<vmem>>, vector<8x256xf32>,
    %c16_i32_74 = arith.constant 16 : i32
    %128 = tpu.dynamic_rotate %121 by %c16_i32_74 dim 1 : vector<8x256xf32>, i32 -> vector<8x256xf32>
    %c1_75 = arith.constant 1 : index
    %c0_76 = arith.constant 0 : index
    %c0_77 = arith.constant 0 : index
    %129 = vector.load %arg15[%c1_75, %c0_76, %c0_77] : memref<9x1x256xf32, #tpu.memory_space<vmem>>, vector<1x1x256xf32>
    %130 = vector.shape_cast %129 : vector<1x1x256xf32> to vector<1x256xf32>
    %131 = vector.broadcast %130 : vector<1x256xf32> to vector<8x256xf32>
    %132 = arith.mulf %128, %131 : vector<8x256xf32>
    %c8_78 = arith.constant 8 : index
    %c0_79 = arith.constant 0 : index
    %133 = vector.load %arg18[%c8_78, %c0_79] : memref<72x256xf32, #tpu.memory_space<vmem>>, vector<8x256xf32>
    tpu.vector_store %arg18[%c8_78, %c0_79], %132 {strides = array<i32>} : memref<72x256xf32, #tpu.memory_space<vmem>>, vector<8x256xf32>,
    %c15_i32_80 = arith.constant 15 : i32
    %134 = tpu.dynamic_rotate %121 by %c15_i32_80 dim 1 : vector<8x256xf32>, i32 -> vector<8x256xf32>
    %c2_81 = arith.constant 2 : index
    %c0_82 = arith.constant 0 : index
    %c0_83 = arith.constant 0 : index
    %135 = vector.load %arg15[%c2_81, %c0_82, %c0_83] : memref<9x1x256xf32, #tpu.memory_space<vmem>>, vector<1x1x256xf32>
    %136 = vector.shape_cast %135 : vector<1x1x256xf32> to vector<1x256xf32>
    %137 = vector.broadcast %136 : vector<1x256xf32> to vector<8x256xf32>
    %138 = arith.mulf %134, %137 : vector<8x256xf32>
    %c16_84 = arith.constant 16 : index
    %c0_85 = arith.constant 0 : index
    %139 = vector.load %arg18[%c16_84, %c0_85] : memref<72x256xf32, #tpu.memory_space<vmem>>, vector<8x256xf32>
    tpu.vector_store %arg18[%c16_84, %c0_85], %138 {strides = array<i32>} : memref<72x256xf32, #tpu.memory_space<vmem>>, vector<8x256xf32>,
    %c1_i32_86 = arith.constant 1 : i32
    %140 = tpu.dynamic_rotate %121 by %c1_i32_86 dim 1 : vector<8x256xf32>, i32 -> vector<8x256xf32>
    %c3_87 = arith.constant 3 : index
    %c0_88 = arith.constant 0 : index
    %c0_89 = arith.constant 0 : index
    %141 = vector.load %arg15[%c3_87, %c0_88, %c0_89] : memref<9x1x256xf32, #tpu.memory_space<vmem>>, vector<1x1x256xf32>
    %142 = vector.shape_cast %141 : vector<1x1x256xf32> to vector<1x256xf32>
    %143 = vector.broadcast %142 : vector<1x256xf32> to vector<8x256xf32>
    %144 = arith.mulf %140, %143 : vector<8x256xf32>
    %c24_90 = arith.constant 24 : index
    %c0_91 = arith.constant 0 : index
    %145 = vector.load %arg18[%c24_90, %c0_91] : memref<72x256xf32, #tpu.memory_space<vmem>>, vector<8x256xf32>
    tpu.vector_store %arg18[%c24_90, %c0_91], %144 {strides = array<i32>} : memref<72x256xf32, #tpu.memory_space<vmem>>, vector<8x256xf32>,
    %c4_92 = arith.constant 4 : index
    %c0_93 = arith.constant 0 : index
    %c0_94 = arith.constant 0 : index
    %146 = vector.load %arg15[%c4_92, %c0_93, %c0_94] : memref<9x1x256xf32, #tpu.memory_space<vmem>>, vector<1x1x256xf32>
    %147 = vector.shape_cast %146 : vector<1x1x256xf32> to vector<1x256xf32>
    %148 = vector.broadcast %147 : vector<1x256xf32> to vector<8x256xf32>
    %149 = arith.mulf %121, %148 : vector<8x256xf32>
    %c32_95 = arith.constant 32 : index
    %c0_96 = arith.constant 0 : index
    %150 = vector.load %arg18[%c32_95, %c0_96] : memref<72x256xf32, #tpu.memory_space<vmem>>, vector<8x256xf32>
    tpu.vector_store %arg18[%c32_95, %c0_96], %149 {strides = array<i32>} : memref<72x256xf32, #tpu.memory_space<vmem>>, vector<8x256xf32>,
    %c255_i32_97 = arith.constant 255 : i32
    %151 = tpu.dynamic_rotate %121 by %c255_i32_97 dim 1 : vector<8x256xf32>, i32 -> vector<8x256xf32>
    %c5_98 = arith.constant 5 : index
    %c0_99 = arith.constant 0 : index
    %c0_100 = arith.constant 0 : index
    %152 = vector.load %arg15[%c5_98, %c0_99, %c0_100] : memref<9x1x256xf32, #tpu.memory_space<vmem>>, vector<1x1x256xf32>
    %153 = vector.shape_cast %152 : vector<1x1x256xf32> to vector<1x256xf32>
    %154 = vector.broadcast %153 : vector<1x256xf32> to vector<8x256xf32>
    %155 = arith.mulf %151, %154 : vector<8x256xf32>
    %c40_101 = arith.constant 40 : index
    %c0_102 = arith.constant 0 : index
    %156 = vector.load %arg18[%c40_101, %c0_102] : memref<72x256xf32, #tpu.memory_space<vmem>>, vector<8x256xf32>
    tpu.vector_store %arg18[%c40_101, %c0_102], %155 {strides = array<i32>} : memref<72x256xf32, #tpu.memory_space<vmem>>, vector<8x256xf32>,
    %c241_i32_103 = arith.constant 241 : i32
    %157 = tpu.dynamic_rotate %121 by %c241_i32_103 dim 1 : vector<8x256xf32>, i32 -> vector<8x256xf32>
    %c6_104 = arith.constant 6 : index
    %c0_105 = arith.constant 0 : index
    %c0_106 = arith.constant 0 : index
    %158 = vector.load %arg15[%c6_104, %c0_105, %c0_106] : memref<9x1x256xf32, #tpu.memory_space<vmem>>, vector<1x1x256xf32>
    %159 = vector.shape_cast %158 : vector<1x1x256xf32> to vector<1x256xf32>
    %160 = vector.broadcast %159 : vector<1x256xf32> to vector<8x256xf32>
    %161 = arith.mulf %157, %160 : vector<8x256xf32>
    %c48_107 = arith.constant 48 : index
    %c0_108 = arith.constant 0 : index
    %162 = vector.load %arg18[%c48_107, %c0_108] : memref<72x256xf32, #tpu.memory_space<vmem>>, vector<8x256xf32>
    tpu.vector_store %arg18[%c48_107, %c0_108], %161 {strides = array<i32>} : memref<72x256xf32, #tpu.memory_space<vmem>>, vector<8x256xf32>,
    %c240_i32_109 = arith.constant 240 : i32
    %163 = tpu.dynamic_rotate %121 by %c240_i32_109 dim 1 : vector<8x256xf32>, i32 -> vector<8x256xf32>
    %c7_110 = arith.constant 7 : index
    %c0_111 = arith.constant 0 : index
    %c0_112 = arith.constant 0 : index
    %164 = vector.load %arg15[%c7_110, %c0_111, %c0_112] : memref<9x1x256xf32, #tpu.memory_space<vmem>>, vector<1x1x256xf32>
    %165 = vector.shape_cast %164 : vector<1x1x256xf32> to vector<1x256xf32>
    %166 = vector.broadcast %165 : vector<1x256xf32> to vector<8x256xf32>
    %167 = arith.mulf %163, %166 : vector<8x256xf32>
    %c56_113 = arith.constant 56 : index
    %c0_114 = arith.constant 0 : index
    %168 = vector.load %arg18[%c56_113, %c0_114] : memref<72x256xf32, #tpu.memory_space<vmem>>, vector<8x256xf32>
    tpu.vector_store %arg18[%c56_113, %c0_114], %167 {strides = array<i32>} : memref<72x256xf32, #tpu.memory_space<vmem>>, vector<8x256xf32>,
    %c239_i32_115 = arith.constant 239 : i32
    %169 = tpu.dynamic_rotate %121 by %c239_i32_115 dim 1 : vector<8x256xf32>, i32 -> vector<8x256xf32>
    %c8_116 = arith.constant 8 : index
    %c0_117 = arith.constant 0 : index
    %c0_118 = arith.constant 0 : index
    %170 = vector.load %arg15[%c8_116, %c0_117, %c0_118] : memref<9x1x256xf32, #tpu.memory_space<vmem>>, vector<1x1x256xf32>
    %171 = vector.shape_cast %170 : vector<1x1x256xf32> to vector<1x256xf32>
    %172 = vector.broadcast %171 : vector<1x256xf32> to vector<8x256xf32>
    %173 = arith.mulf %169, %172 : vector<8x256xf32>
    %c64_119 = arith.constant 64 : index
    %c0_120 = arith.constant 0 : index
    %174 = vector.load %arg18[%c64_119, %c0_120] : memref<72x256xf32, #tpu.memory_space<vmem>>, vector<8x256xf32>
    tpu.vector_store %arg18[%c64_119, %c0_120], %173 {strides = array<i32>} : memref<72x256xf32, #tpu.memory_space<vmem>>, vector<8x256xf32>,
    %c0_121 = arith.constant 0 : index
    %c0_122 = arith.constant 0 : index
    %175 = vector.load %arg18[%c0_121, %c0_122] : memref<72x256xf32, #tpu.memory_space<vmem>>, vector<72x256xf32>
    %176 = arith.truncf %175 : vector<72x256xf32> to vector<72x256xbf16>
    %c0_123 = arith.constant 0 : index
    %c0_124 = arith.constant 0 : index
    %177 = vector.load %arg11[%c0_123, %c0_124] : memref<8x72xbf16, #tpu.memory_space<vmem>>, vector<8x72xbf16>
    %cst_125 = arith.constant dense<0.000000e+00> : vector<8x256xf32>
    %178 = tpu.matmul %177, %176, %cst_125 {dimension_numbers = #tpu.dot_dimension_numbers<[1], [0], [0], [1], [0, 0, 1, 1], [], []>} : vector<8x72xbf16>, vector<72x256xbf16>, vector<8x256xf32> -> vector<8x256xf32>
    %c0_126 = arith.constant 0 : index
    %c0_127 = arith.constant 0 : index
    %179 = vector.load %arg12[%c0_126, %c0_127] : memref<8x1xf32, #tpu.memory_space<vmem>>, vector<8x1xf32>
    %180 = vector.broadcast %179 : vector<8x1xf32> to vector<8x256xf32>
    %181 = arith.addf %178, %180 : vector<8x256xf32>
    %c0_128 = arith.constant 0 : index
    %c0_129 = arith.constant 0 : index
    %182 = vector.load %arg13[%c0_128, %c0_129] : memref<8x4xbf16, #tpu.memory_space<vmem>>, vector<8x4xbf16>
    %183 = arith.truncf %1 : vector<4x256xf32> to vector<4x256xbf16>
    %cst_130 = arith.constant dense<0.000000e+00> : vector<8x256xf32>
    %184 = tpu.matmul %182, %183, %cst_130 {dimension_numbers = #tpu.dot_dimension_numbers<[1], [0], [0], [1], [0, 0, 1, 1], [], []>} : vector<8x4xbf16>, vector<4x256xbf16>, vector<8x256xf32> -> vector<8x256xf32>
    %c0_131 = arith.constant 0 : index
    %c0_132 = arith.constant 0 : index
    %185 = vector.load %arg14[%c0_131, %c0_132] : memref<8x1xf32, #tpu.memory_space<vmem>>, vector<8x1xf32>
    %186 = vector.broadcast %185 : vector<8x1xf32> to vector<8x256xf32>
    %187 = arith.addf %184, %186 : vector<8x256xf32>
    %188 = arith.addf %181, %187 : vector<8x256xf32>
    %c0_133 = arith.constant 0 : index
    %c0_134 = arith.constant 0 : index
    %c0_135 = arith.constant 0 : index
    %189 = vector.load %arg16[%c0_133, %c0_134, %c0_135] : memref<1x8x256xf32, #tpu.memory_space<vmem>>, vector<1x8x256xf32>
    %190 = vector.shape_cast %189 : vector<1x8x256xf32> to vector<8x256xf32>
    %191 = vector.shape_cast %188 : vector<8x256xf32> to vector<1x8x256xf32>
    tpu.vector_store %arg16[%c0_133, %c0_134, %c0_135], %191 {strides = array<i32>} : memref<1x8x256xf32, #tpu.memory_space<vmem>>, vector<1x8x256xf32>,
    return
  }
  func.func @transform_0(%arg0: i32) -> (i32, i32, i32) {
    %c0_i32 = arith.constant 0 : i32
    %c0_i32_0 = arith.constant 0 : i32
    %c0_i32_1 = arith.constant 0 : i32
    return %arg0, %c0_i32, %c0_i32_0 : i32, i32, i32
  }
  func.func @transform_1(%arg0: i32) -> (i32, i32, i32) {
    %c0_i32 = arith.constant 0 : i32
    %c0_i32_0 = arith.constant 0 : i32
    %c0_i32_1 = arith.constant 0 : i32
    return %arg0, %c0_i32, %c0_i32_0 : i32, i32, i32
  }
  func.func @transform_2(%arg0: i32) -> (i32, i32) {
    %c0_i32 = arith.constant 0 : i32
    %c0_i32_0 = arith.constant 0 : i32
    %c0_i32_1 = arith.constant 0 : i32
    return %c0_i32, %c0_i32_0 : i32, i32
  }
  func.func @transform_3(%arg0: i32) -> (i32, i32) {
    %c0_i32 = arith.constant 0 : i32
    %c0_i32_0 = arith.constant 0 : i32
    %c0_i32_1 = arith.constant 0 : i32
    return %c0_i32, %c0_i32_0 : i32, i32
  }
  func.func @transform_4(%arg0: i32) -> (i32, i32) {
    %c0_i32 = arith.constant 0 : i32
    %c0_i32_0 = arith.constant 0 : i32
    %c0_i32_1 = arith.constant 0 : i32
    return %c0_i32, %c0_i32_0 : i32, i32
  }
  func.func @transform_5(%arg0: i32) -> (i32, i32) {
    %c0_i32 = arith.constant 0 : i32
    %c0_i32_0 = arith.constant 0 : i32
    %c0_i32_1 = arith.constant 0 : i32
    return %c0_i32, %c0_i32_0 : i32, i32
  }
  func.func @transform_6(%arg0: i32) -> (i32, i32) {
    %c0_i32 = arith.constant 0 : i32
    %c0_i32_0 = arith.constant 0 : i32
    %c0_i32_1 = arith.constant 0 : i32
    return %c0_i32, %c0_i32_0 : i32, i32
  }
  func.func @transform_7(%arg0: i32) -> (i32, i32) {
    %c0_i32 = arith.constant 0 : i32
    %c0_i32_0 = arith.constant 0 : i32
    %c0_i32_1 = arith.constant 0 : i32
    return %c0_i32, %c0_i32_0 : i32, i32
  }
  func.func @transform_8(%arg0: i32) -> (i32, i32) {
    %c0_i32 = arith.constant 0 : i32
    %c0_i32_0 = arith.constant 0 : i32
    %c0_i32_1 = arith.constant 0 : i32
    return %c0_i32, %c0_i32_0 : i32, i32
  }
  func.func @transform_9(%arg0: i32) -> (i32, i32) {
    %c0_i32 = arith.constant 0 : i32
    %c0_i32_0 = arith.constant 0 : i32
    %c0_i32_1 = arith.constant 0 : i32
    return %c0_i32, %c0_i32_0 : i32, i32
  }
  func.func @transform_10(%arg0: i32) -> (i32, i32) {
    %c0_i32 = arith.constant 0 : i32
    %c0_i32_0 = arith.constant 0 : i32
    %c0_i32_1 = arith.constant 0 : i32
    return %c0_i32, %c0_i32_0 : i32, i32
  }
  func.func @transform_11(%arg0: i32) -> (i32, i32) {
    %c0_i32 = arith.constant 0 : i32
    %c0_i32_0 = arith.constant 0 : i32
    %c0_i32_1 = arith.constant 0 : i32
    return %c0_i32, %c0_i32_0 : i32, i32
  }
  func.func @transform_12(%arg0: i32) -> (i32, i32) {
    %c0_i32 = arith.constant 0 : i32
    %c0_i32_0 = arith.constant 0 : i32
    %c0_i32_1 = arith.constant 0 : i32
    return %c0_i32, %c0_i32_0 : i32, i32
  }
  func.func @transform_13(%arg0: i32) -> (i32, i32) {
    %c0_i32 = arith.constant 0 : i32
    %c0_i32_0 = arith.constant 0 : i32
    %c0_i32_1 = arith.constant 0 : i32
    return %c0_i32, %c0_i32_0 : i32, i32
  }
  func.func @transform_14(%arg0: i32) -> (i32, i32, i32) {
    %c0_i32 = arith.constant 0 : i32
    %c0_i32_0 = arith.constant 0 : i32
    %c0_i32_1 = arith.constant 0 : i32
    %c0_i32_2 = arith.constant 0 : i32
    return %c0_i32, %c0_i32_0, %c0_i32_1 : i32, i32, i32
  }
  func.func @transform_15(%arg0: i32) -> (i32, i32, i32) {
    %c0_i32 = arith.constant 0 : i32
    %c0_i32_0 = arith.constant 0 : i32
    %c0_i32_1 = arith.constant 0 : i32
    return %arg0, %c0_i32, %c0_i32_0 : i32, i32, i32
  }
}

</mosaic_0001>

<llo_original>
// kernel: tpu_custom_call.1
$region0: #{tpu_custom_call.1}
  #allocation0 [shape = 'u32[]', space=smem, size = 0x4, offset = 0x4, fixed_abs, tag = 'smem constant byte address 0x4 - core index']
  #allocation1 [shape = 'u32[144,128]{1,0:T(1,128)}', space=vmem, size = 0x12000, scoped, tag = 'internal scratch']
  #allocation2 [shape = 'f32[72,256]{1,0:T(8,128)}', space=vmem, size = 0x12000, scoped, tag = 'scratch operand']
  #allocation3 [shape = 'f32[72,256]{1,0:T(8,128)}', space=vmem, size = 0x12000, scoped, tag = 'scratch operand']
  %s0 = inlined_call_operand.vmem [shape: f32[2,4,256], index: 0, kind: input, shape index: {}]
  %s1 = inlined_call_operand.vmem [shape: f32[2,8,1], index: 1, kind: input, shape index: {}]
  %s2 = inlined_call_operand.vmem [shape: f32[4,1], index: 2, kind: input, shape index: {}]
  %s3 = inlined_call_operand.vmem [shape: f32[4,1], index: 3, kind: input, shape index: {}]
  %s4 = inlined_call_operand.vmem [shape: f32[4,4], index: 4, kind: input, shape index: {}]
  %s5 = inlined_call_operand.vmem [shape: bf16[8,72], index: 5, kind: input, shape index: {}]
  %s6 = inlined_call_operand.vmem [shape: f32[8,1], index: 6, kind: input, shape index: {}]
  %s7 = inlined_call_operand.vmem [shape: f32[8,1], index: 7, kind: input, shape index: {}]
  %s8 = inlined_call_operand.vmem [shape: f32[8,1], index: 8, kind: input, shape index: {}]
  %s9 = inlined_call_operand.vmem [shape: f32[8,8], index: 9, kind: input, shape index: {}]
  %s10 = inlined_call_operand.vmem [shape: bf16[8,72], index: 10, kind: input, shape index: {}]
  %s11 = inlined_call_operand.vmem [shape: f32[8,1], index: 11, kind: input, shape index: {}]
  %s12 = inlined_call_operand.vmem [shape: bf16[8,4], index: 12, kind: input, shape index: {}]
  %s13 = inlined_call_operand.vmem [shape: f32[8,1], index: 13, kind: input, shape index: {}]
  %s14 = inlined_call_operand.vmem [shape: f32[9,1,256], index: 14, kind: input, shape index: {}]
  %s15 = inlined_call_operand.hbm [shape: f32[2,8,256], index: 15, kind: output, shape index: {}]
  %s16 = sld [smem:[#allocation0]]
  $region93: #{tpu_custom_call.1} parent=0
    _
  %s18 = ssub.s32 1, %s16
  %s19 = scalar_select 0, %s18, %s16
  $region1: #{tpu_custom_call.1} parent=0
    #allocation4 [shape = 'u8[16384]{0}', space=vmem, size = 0x4000, scoped, tag = 'output window, operand 0']
    #allocation5 [shape = 's32[2]{0}', space=sflag, size = 0x8, scoped, tag = 'scoped memory for tpu_custom_call.1']
    %20 = vsyncpa [#allocation5], 0
    %s21 = scalar_lea.sflag [#allocation5], 1
    %22 = vsyncpa %s21, 0
    loop: start=0, step=1, limit=4
    $region2: #{tpu_custom_call.1} parent=1 // loop_pre_header
      _
    $region3: #{tpu_custom_call.1} parent=1 // loop_header
      %s24 = sphi 0, %s28
      %p25 = scmp.ge.s32.totalorder %s24, 4
      %s34 = sphi 0, %s36
      %s37 = sphi 0, %s34
      %s38 = sphi 0, %s37
      %s54 = sphi 0, %s38
      %s60 = sphi 0, %s62
      %s63 = sphi 0, %s60
      %s64 = sphi 0, %s63
      %s80 = sphi 0, %s64
      %s84 = sphi 0, %s84
      %s86 = sphi 0, %s84
      %s87 = sphi 0, %s86
      %s101 = sphi 0, %s87
      %s105 = sphi 0, %s105
      %s107 = sphi 0, %s105
      %s108 = sphi 0, %s107
      %s122 = sphi 0, %s108
      %s126 = sphi 0, %s126
      %s128 = sphi 0, %s126
      %s129 = sphi 0, %s128
      %s143 = sphi 0, %s129
      %s147 = sphi 0, %s147
      %s149 = sphi 0, %s147
      %s150 = sphi 0, %s149
      %s164 = sphi 0, %s150
      %s168 = sphi 0, %s168
      %s170 = sphi 0, %s168
      %s171 = sphi 0, %s170
      %s185 = sphi 0, %s171
      %s189 = sphi 0, %s189
      %s191 = sphi 0, %s189
      %s192 = sphi 0, %s191
      %s206 = sphi 0, %s192
      %s210 = sphi 0, %s210
      %s212 = sphi 0, %s210
      %s213 = sphi 0, %s212
      %s227 = sphi 0, %s213
      %s231 = sphi 0, %s231
      %s233 = sphi 0, %s231
      %s234 = sphi 0, %s233
      %s248 = sphi 0, %s234
      %s252 = sphi 0, %s252
      %s254 = sphi 0, %s252
      %s255 = sphi 0, %s254
      %s269 = sphi 0, %s255
      %s273 = sphi 0, %s273
      %s275 = sphi 0, %s273
      %s276 = sphi 0, %s275
      %s290 = sphi 0, %s276
      %s294 = sphi 0, %s294
      %s296 = sphi 0, %s294
      %s297 = sphi 0, %s296
      %s311 = sphi 0, %s297
      %s315 = sphi 0, %s315
      %s317 = sphi 0, %s315
      %s318 = sphi 0, %s317
      %s332 = sphi 0, %s318
      %s336 = sphi 0, %s336
      %s338 = sphi 0, %s336
      %s339 = sphi 0, %s338
      %s353 = sphi 0, %s339
      %s359 = sphi 0, %s361
      %s362 = sphi 0, %s359
      %s363 = sphi 0, %s362
      %s379 = sphi 0, %s363
    $region4: #{tpu_custom_call.1} parent=1 // loop_header_branch
      %27 = sbr.rel (%p25) target = $region8
    $region5: #{tpu_custom_call.1} parent=1 // loop_body
      %s29 = ssub.s32 %s24, 1
      %s30 = ssub.s32 %s24, 2
      %s31 = sadd.s32 %s24, 1
      %s32 = ssub.s32 %s24, %s31
      %p33 = scmp.eq.s32.totalorder %s32, 0
      %s35 = sadd.s32 %s34, 1
      %s36 = scalar_select %p33, %s34, %s35
      %p39 = pneg %p33
      %p40 = scmp.eq.s32.totalorder %s24, 1
      %p41 = por %p39, %p40
      %p42 = scmp.ne.s32.totalorder %s34, %s37
      %p43 = scmp.eq.s32.totalorder %s24, 0
      %p44 = por %p42, %p43
      %p45 = scmp.ne.s32.totalorder %s34, %s37
      %p46 = scmp.eq.s32.totalorder %s29, 1
      %p47 = por %p45, %p46
      %p48 = scmp.ne.s32.totalorder %s37, %s38
      %p49 = scmp.eq.s32.totalorder %s29, 0
      %p50 = por %p48, %p49
      %p51 = scmp.ne.s32.totalorder %s37, %s38
      %p52 = scmp.eq.s32.totalorder %s30, 1
      %p53 = por %p51, %p52
      %p55 = scmp.ne.s32.totalorder %s38, %s54
      %p56 = scmp.eq.s32.totalorder %s30, 0
      %p57 = por %p55, %p56
      %s58 = ssub.s32 %s24, %s31
      %p59 = scmp.eq.s32.totalorder %s58, 0
      %s61 = sadd.s32 %s60, 1
      %s62 = scalar_select %p59, %s60, %s61
      %p65 = pneg %p59
      %p66 = scmp.eq.s32.totalorder %s24, 1
      %p67 = por %p65, %p66
      %p68 = scmp.ne.s32.totalorder %s60, %s63
      %p69 = scmp.eq.s32.totalorder %s24, 0
      %p70 = por %p68, %p69
      %p71 = scmp.ne.s32.totalorder %s60, %s63
      %p72 = scmp.eq.s32.totalorder %s29, 1
      %p73 = por %p71, %p72
      %p74 = scmp.ne.s32.totalorder %s63, %s64
      %p75 = scmp.eq.s32.totalorder %s29, 0
      %p76 = por %p74, %p75
      %p77 = scmp.ne.s32.totalorder %s63, %s64
      %p78 = scmp.eq.s32.totalorder %s30, 1
      %p79 = por %p77, %p78
      %p81 = scmp.ne.s32.totalorder %s64, %s80
      %p82 = scmp.eq.s32.totalorder %s30, 0
      %p83 = por %p81, %p82
      %s85 = sadd.s32 %s84, 1
      %p88 = scmp.eq.s32.totalorder %s24, 1
      %p89 = scmp.ne.s32.totalorder %s84, %s86
      %p90 = scmp.eq.s32.totalorder %s24, 0
      %p91 = por %p89, %p90
      %p92 = scmp.ne.s32.totalorder %s84, %s86
      %p93 = scmp.eq.s32.totalorder %s29, 1
      %p94 = por %p92, %p93
      %p95 = scmp.ne.s32.totalorder %s86, %s87
      %p96 = scmp.eq.s32.totalorder %s29, 0
      %p97 = por %p95, %p96
      %p98 = scmp.ne.s32.totalorder %s86, %s87
      %p99 = scmp.eq.s32.totalorder %s30, 1
      %p100 = por %p98, %p99
      %p102 = scmp.ne.s32.totalorder %s87, %s101
      %p103 = scmp.eq.s32.totalorder %s30, 0
      %p104 = por %p102, %p103
      %s106 = sadd.s32 %s105, 1
      %p109 = scmp.eq.s32.totalorder %s24, 1
      %p110 = scmp.ne.s32.totalorder %s105, %s107
      %p111 = scmp.eq.s32.totalorder %s24, 0
      %p112 = por %p110, %p111
      %p113 = scmp.ne.s32.totalorder %s105, %s107
      %p114 = scmp.eq.s32.totalorder %s29, 1
      %p115 = por %p113, %p114
      %p116 = scmp.ne.s32.totalorder %s107, %s108
      %p117 = scmp.eq.s32.totalorder %s29, 0
      %p118 = por %p116, %p117
      %p119 = scmp.ne.s32.totalorder %s107, %s108
      %p120 = scmp.eq.s32.totalorder %s30, 1
      %p121 = por %p119, %p120
      %p123 = scmp.ne.s32.totalorder %s108, %s122
      %p124 = scmp.eq.s32.totalorder %s30, 0
      %p125 = por %p123, %p124
      %s127 = sadd.s32 %s126, 1
      %p130 = scmp.eq.s32.totalorder %s24, 1
      %p131 = scmp.ne.s32.totalorder %s126, %s128
      %p132 = scmp.eq.s32.totalorder %s24, 0
      %p133 = por %p131, %p132
      %p134 = scmp.ne.s32.totalorder %s126, %s128
      %p135 = scmp.eq.s32.totalorder %s29, 1
      %p136 = por %p134, %p135
      %p137 = scmp.ne.s32.totalorder %s128, %s129
      %p138 = scmp.eq.s32.totalorder %s29, 0
      %p139 = por %p137, %p138
      %p140 = scmp.ne.s32.totalorder %s128, %s129
      %p141 = scmp.eq.s32.totalorder %s30, 1
      %p142 = por %p140, %p141
      %p144 = scmp.ne.s32.totalorder %s129, %s143
      %p145 = scmp.eq.s32.totalorder %s30, 0
      %p146 = por %p144, %p145
      %s148 = sadd.s32 %s147, 1
      %p151 = scmp.eq.s32.totalorder %s24, 1
      %p152 = scmp.ne.s32.totalorder %s147, %s149
      %p153 = scmp.eq.s32.totalorder %s24, 0
      %p154 = por %p152, %p153
      %p155 = scmp.ne.s32.totalorder %s147, %s149
      %p156 = scmp.eq.s32.totalorder %s29, 1
      %p157 = por %p155, %p156
      %p158 = scmp.ne.s32.totalorder %s149, %s150
      %p159 = scmp.eq.s32.totalorder %s29, 0
      %p160 = por %p158, %p159
      %p161 = scmp.ne.s32.totalorder %s149, %s150
      %p162 = scmp.eq.s32.totalorder %s30, 1
      %p163 = por %p161, %p162
      %p165 = scmp.ne.s32.totalorder %s150, %s164
      %p166 = scmp.eq.s32.totalorder %s30, 0
      %p167 = por %p165, %p166
      %s169 = sadd.s32 %s168, 1
      %p172 = scmp.eq.s32.totalorder %s24, 1
      %p173 = scmp.ne.s32.totalorder %s168, %s170
      %p174 = scmp.eq.s32.totalorder %s24, 0
      %p175 = por %p173, %p174
      %p176 = scmp.ne.s32.totalorder %s168, %s170
      %p177 = scmp.eq.s32.totalorder %s29, 1
      %p178 = por %p176, %p177
      %p179 = scmp.ne.s32.totalorder %s170, %s171
      %p180 = scmp.eq.s32.totalorder %s29, 0
      %p181 = por %p179, %p180
      %p182 = scmp.ne.s32.totalorder %s170, %s171
      %p183 = scmp.eq.s32.totalorder %s30, 1
      %p184 = por %p182, %p183
      %p186 = scmp.ne.s32.totalorder %s171, %s185
      %p187 = scmp.eq.s32.totalorder %s30, 0
      %p188 = por %p186, %p187
      %s190 = sadd.s32 %s189, 1
      %p193 = scmp.eq.s32.totalorder %s24, 1
      %p194 = scmp.ne.s32.totalorder %s189, %s191
      %p195 = scmp.eq.s32.totalorder %s24, 0
      %p196 = por %p194, %p195
      %p197 = scmp.ne.s32.totalorder %s189, %s191
      %p198 = scmp.eq.s32.totalorder %s29, 1
      %p199 = por %p197, %p198
      %p200 = scmp.ne.s32.totalorder %s191, %s192
      %p201 = scmp.eq.s32.totalorder %s29, 0
      %p202 = por %p200, %p201
      %p203 = scmp.ne.s32.totalorder %s191, %s192
      %p204 = scmp.eq.s32.totalorder %s30, 1
      %p205 = por %p203, %p204
      %p207 = scmp.ne.s32.totalorder %s192, %s206
      %p208 = scmp.eq.s32.totalorder %s30, 0
      %p209 = por %p207, %p208
      %s211 = sadd.s32 %s210, 1
      %p214 = scmp.eq.s32.totalorder %s24, 1
      %p215 = scmp.ne.s32.totalorder %s210, %s212
      %p216 = scmp.eq.s32.totalorder %s24, 0
      %p217 = por %p215, %p216
      %p218 = scmp.ne.s32.totalorder %s210, %s212
      %p219 = scmp.eq.s32.totalorder %s29, 1
      %p220 = por %p218, %p219
      %p221 = scmp.ne.s32.totalorder %s212, %s213
      %p222 = scmp.eq.s32.totalorder %s29, 0
      %p223 = por %p221, %p222
      %p224 = scmp.ne.s32.totalorder %s212, %s213
      %p225 = scmp.eq.s32.totalorder %s30, 1
      %p226 = por %p224, %p225
      %p228 = scmp.ne.s32.totalorder %s213, %s227
      %p229 = scmp.eq.s32.totalorder %s30, 0
      %p230 = por %p228, %p229
      %s232 = sadd.s32 %s231, 1
      %p235 = scmp.eq.s32.totalorder %s24, 1
      %p236 = scmp.ne.s32.totalorder %s231, %s233
      %p237 = scmp.eq.s32.totalorder %s24, 0
      %p238 = por %p236, %p237
      %p239 = scmp.ne.s32.totalorder %s231, %s233
      %p240 = scmp.eq.s32.totalorder %s29, 1
      %p241 = por %p239, %p240
      %p242 = scmp.ne.s32.totalorder %s233, %s234
      %p243 = scmp.eq.s32.totalorder %s29, 0
      %p244 = por %p242, %p243
      %p245 = scmp.ne.s32.totalorder %s233, %s234
      %p246 = scmp.eq.s32.totalorder %s30, 1
      %p247 = por %p245, %p246
      %p249 = scmp.ne.s32.totalorder %s234, %s248
      %p250 = scmp.eq.s32.totalorder %s30, 0
      %p251 = por %p249, %p250
      %s253 = sadd.s32 %s252, 1
      %p256 = scmp.eq.s32.totalorder %s24, 1
      %p257 = scmp.ne.s32.totalorder %s252, %s254
      %p258 = scmp.eq.s32.totalorder %s24, 0
      %p259 = por %p257, %p258
      %p260 = scmp.ne.s32.totalorder %s252, %s254
      %p261 = scmp.eq.s32.totalorder %s29, 1
      %p262 = por %p260, %p261
      %p263 = scmp.ne.s32.totalorder %s254, %s255
      %p264 = scmp.eq.s32.totalorder %s29, 0
      %p265 = por %p263, %p264
      %p266 = scmp.ne.s32.totalorder %s254, %s255
      %p267 = scmp.eq.s32.totalorder %s30, 1
      %p268 = por %p266, %p267
      %p270 = scmp.ne.s32.totalorder %s255, %s269
      %p271 = scmp.eq.s32.totalorder %s30, 0
      %p272 = por %p270, %p271
      %s274 = sadd.s32 %s273, 1
      %p277 = scmp.eq.s32.totalorder %s24, 1
      %p278 = scmp.ne.s32.totalorder %s273, %s275
      %p279 = scmp.eq.s32.totalorder %s24, 0
      %p280 = por %p278, %p279
      %p281 = scmp.ne.s32.totalorder %s273, %s275
      %p282 = scmp.eq.s32.totalorder %s29, 1
      %p283 = por %p281, %p282
      %p284 = scmp.ne.s32.totalorder %s275, %s276
      %p285 = scmp.eq.s32.totalorder %s29, 0
      %p286 = por %p284, %p285
      %p287 = scmp.ne.s32.totalorder %s275, %s276
      %p288 = scmp.eq.s32.totalorder %s30, 1
      %p289 = por %p287, %p288
      %p291 = scmp.ne.s32.totalorder %s276, %s290
      %p292 = scmp.eq.s32.totalorder %s30, 0
      %p293 = por %p291, %p292
      %s295 = sadd.s32 %s294, 1
      %p298 = scmp.eq.s32.totalorder %s24, 1
      %p299 = scmp.ne.s32.totalorder %s294, %s296
      %p300 = scmp.eq.s32.totalorder %s24, 0
      %p301 = por %p299, %p300
      %p302 = scmp.ne.s32.totalorder %s294, %s296
      %p303 = scmp.eq.s32.totalorder %s29, 1
      %p304 = por %p302, %p303
      %p305 = scmp.ne.s32.totalorder %s296, %s297
      %p306 = scmp.eq.s32.totalorder %s29, 0
      %p307 = por %p305, %p306
      %p308 = scmp.ne.s32.totalorder %s296, %s297
      %p309 = scmp.eq.s32.totalorder %s30, 1
      %p310 = por %p308, %p309
      %p312 = scmp.ne.s32.totalorder %s297, %s311
      %p313 = scmp.eq.s32.totalorder %s30, 0
      %p314 = por %p312, %p313
      %s316 = sadd.s32 %s315, 1
      %p319 = scmp.eq.s32.totalorder %s24, 1
      %p320 = scmp.ne.s32.totalorder %s315, %s317
      %p321 = scmp.eq.s32.totalorder %s24, 0
      %p322 = por %p320, %p321
      %p323 = scmp.ne.s32.totalorder %s315, %s317
      %p324 = scmp.eq.s32.totalorder %s29, 1
      %p325 = por %p323, %p324
      %p326 = scmp.ne.s32.totalorder %s317, %s318
      %p327 = scmp.eq.s32.totalorder %s29, 0
      %p328 = por %p326, %p327
      %p329 = scmp.ne.s32.totalorder %s317, %s318
      %p330 = scmp.eq.s32.totalorder %s30, 1
      %p331 = por %p329, %p330
      %p333 = scmp.ne.s32.totalorder %s318, %s332
      %p334 = scmp.eq.s32.totalorder %s30, 0
      %p335 = por %p333, %p334
      %s337 = sadd.s32 %s336, 1
      %p340 = scmp.eq.s32.totalorder %s24, 1
      %p341 = scmp.ne.s32.totalorder %s336, %s338
      %p342 = scmp.eq.s32.totalorder %s24, 0
      %p343 = por %p341, %p342
      %p344 = scmp.ne.s32.totalorder %s336, %s338
      %p345 = scmp.eq.s32.totalorder %s29, 1
      %p346 = por %p344, %p345
      %p347 = scmp.ne.s32.totalorder %s338, %s339
      %p348 = scmp.eq.s32.totalorder %s29, 0
      %p349 = por %p347, %p348
      %p350 = scmp.ne.s32.totalorder %s338, %s339
      %p351 = scmp.eq.s32.totalorder %s30, 1
      %p352 = por %p350, %p351
      %p354 = scmp.ne.s32.totalorder %s339, %s353
      %p355 = scmp.eq.s32.totalorder %s30, 0
      %p356 = por %p354, %p355
      %s357 = ssub.s32 %s24, %s31
      %p358 = scmp.eq.s32.totalorder %s357, 0
      %s360 = sadd.s32 %s359, 1
      %s361 = scalar_select %p358, %s359, %s360
      %p364 = pneg %p358
      %p365 = scmp.eq.s32.totalorder %s24, 1
      %p366 = por %p364, %p365
      %p367 = scmp.ne.s32.totalorder %s359, %s362
      %p368 = scmp.eq.s32.totalorder %s24, 0
      %p369 = por %p367, %p368
      %p370 = scmp.ne.s32.totalorder %s359, %s362
      %p371 = scmp.eq.s32.totalorder %s29, 1
      %p372 = por %p370, %p371
      %p373 = scmp.ne.s32.totalorder %s362, %s363
      %p374 = scmp.eq.s32.totalorder %s29, 0
      %p375 = por %p373, %p374
      %p376 = scmp.ne.s32.totalorder %s362, %s363
      %p377 = scmp.eq.s32.totalorder %s30, 1
      %p378 = por %p376, %p377
      %p380 = scmp.ne.s32.totalorder %s363, %s379
      %p381 = scmp.eq.s32.totalorder %s30, 0
      %p382 = por %p380, %p381
      %p383 = scmp.le.s32.totalorder 1, %s24
      %p384 = scmp.lt.s32.totalorder %s24, 3
      %p385 = pnand %p383, %p384
      %p386 = pneg %p385
      // Predicated region
      $region9: #{tpu_custom_call.1} parent=5 // pred_check
        _
      $region10: #{tpu_custom_call.1} parent=5 // pred_check_branch
        %388 = sbr.rel (%p385) target = $region12
      $region11: #{tpu_custom_call.1} parent=5 // pred_region
        %s389 = ssub.s32 %s24, 1
        // Predicated region
        $region13: #{tpu_custom_call.1} parent=11 // pred_check
          %p390 = pneg %p97
        $region14: #{tpu_custom_call.1} parent=11 // pred_check_branch
          %392 = sbr.rel (%p390) target = $region16
        $region15: #{tpu_custom_call.1} parent=11 // pred_region
          _
        $region16: #{tpu_custom_call.1} parent=11 // pred_fallthru
          _
        // Predicated region
        $region17: #{tpu_custom_call.1} parent=11 // pred_check
          %p393 = pneg %p118
        $region18: #{tpu_custom_call.1} parent=11 // pred_check_branch
          %395 = sbr.rel (%p393) target = $region20
        $region19: #{tpu_custom_call.1} parent=11 // pred_region
          _
        $region20: #{tpu_custom_call.1} parent=11 // pred_fallthru
          _
        // Predicated region
        $region21: #{tpu_custom_call.1} parent=11 // pred_check
          %p396 = pneg %p139
        $region22: #{tpu_custom_call.1} parent=11 // pred_check_branch
          %398 = sbr.rel (%p396) target = $region24
        $region23: #{tpu_custom_call.1} parent=11 // pred_region
          _
        $region24: #{tpu_custom_call.1} parent=11 // pred_fallthru
          _
        // Predicated region
        $region25: #{tpu_custom_call.1} parent=11 // pred_check
          %p399 = pneg %p160
        $region26: #{tpu_custom_call.1} parent=11 // pred_check_branch
          %401 = sbr.rel (%p399) target = $region28
        $region27: #{tpu_custom_call.1} parent=11 // pred_region
          _
        $region28: #{tpu_custom_call.1} parent=11 // pred_fallthru
          _
        // Predicated region
        $region29: #{tpu_custom_call.1} parent=11 // pred_check
          %p402 = pneg %p181
        $region30: #{tpu_custom_call.1} parent=11 // pred_check_branch
          %404 = sbr.rel (%p402) target = $region32
        $region31: #{tpu_custom_call.1} parent=11 // pred_region
          _
        $region32: #{tpu_custom_call.1} parent=11 // pred_fallthru
          _
        // Predicated region
        $region33: #{tpu_custom_call.1} parent=11 // pred_check
          %p405 = pneg %p202
        $region34: #{tpu_custom_call.1} parent=11 // pred_check_branch
          %407 = sbr.rel (%p405) target = $region36
        $region35: #{tpu_custom_call.1} parent=11 // pred_region
          _
        $region36: #{tpu_custom_call.1} parent=11 // pred_fallthru
          _
        // Predicated region
        $region37: #{tpu_custom_call.1} parent=11 // pred_check
          %p408 = pneg %p223
        $region38: #{tpu_custom_call.1} parent=11 // pred_check_branch
          %410 = sbr.rel (%p408) target = $region40
        $region39: #{tpu_custom_call.1} parent=11 // pred_region
          _
        $region40: #{tpu_custom_call.1} parent=11 // pred_fallthru
          _
        // Predicated region
        $region41: #{tpu_custom_call.1} parent=11 // pred_check
          %p411 = pneg %p244
        $region42: #{tpu_custom_call.1} parent=11 // pred_check_branch
          %413 = sbr.rel (%p411) target = $region44
        $region43: #{tpu_custom_call.1} parent=11 // pred_region
          _
        $region44: #{tpu_custom_call.1} parent=11 // pred_fallthru
          _
        // Predicated region
        $region45: #{tpu_custom_call.1} parent=11 // pred_check
          %p414 = pneg %p265
        $region46: #{tpu_custom_call.1} parent=11 // pred_check_branch
          %416 = sbr.rel (%p414) target = $region48
        $region47: #{tpu_custom_call.1} parent=11 // pred_region
          _
        $region48: #{tpu_custom_call.1} parent=11 // pred_fallthru
          _
        // Predicated region
        $region49: #{tpu_custom_call.1} parent=11 // pred_check
          %p417 = pneg %p286
        $region50: #{tpu_custom_call.1} parent=11 // pred_check_branch
          %419 = sbr.rel (%p417) target = $region52
        $region51: #{tpu_custom_call.1} parent=11 // pred_region
          _
        $region52: #{tpu_custom_call.1} parent=11 // pred_fallthru
          _
        // Predicated region
        $region53: #{tpu_custom_call.1} parent=11 // pred_check
          %p420 = pneg %p307
        $region54: #{tpu_custom_call.1} parent=11 // pred_check_branch
          %422 = sbr.rel (%p420) target = $region56
        $region55: #{tpu_custom_call.1} parent=11 // pred_region
          _
        $region56: #{tpu_custom_call.1} parent=11 // pred_fallthru
          _
        // Predicated region
        $region57: #{tpu_custom_call.1} parent=11 // pred_check
          %p423 = pneg %p328
        $region58: #{tpu_custom_call.1} parent=11 // pred_check_branch
          %425 = sbr.rel (%p423) target = $region60
        $region59: #{tpu_custom_call.1} parent=11 // pred_region
          _
        $region60: #{tpu_custom_call.1} parent=11 // pred_fallthru
          _
        // Predicated region
        $region61: #{tpu_custom_call.1} parent=11 // pred_check
          %p426 = pneg %p349
        $region62: #{tpu_custom_call.1} parent=11 // pred_check_branch
          %428 = sbr.rel (%p426) target = $region64
        $region63: #{tpu_custom_call.1} parent=11 // pred_region
          _
        $region64: #{tpu_custom_call.1} parent=11 // pred_fallthru
          _
      $region12: #{tpu_custom_call.1} parent=5 // pred_fallthru
        _
      %p429 = scmp.lt.s32.totalorder %s24, 2
      // Predicated region
      $region65: #{tpu_custom_call.1} parent=5 // pred_check
        %p430 = pneg %p429
      $region66: #{tpu_custom_call.1} parent=5 // pred_check_branch
        %432 = sbr.rel (%p430) target = $region68
      $region67: #{tpu_custom_call.1} parent=5 // pred_region
        // Predicated region
        $region69: #{tpu_custom_call.1} parent=67 // pred_check
          %p433 = pneg %p44
        $region70: #{tpu_custom_call.1} parent=67 // pred_check_branch
          %435 = sbr.rel (%p433) target = $region72
        $region71: #{tpu_custom_call.1} parent=67 // pred_region
          %p436 = scmp.lt.s32.totalorder %s24, 1
          %s437 = scalar_select %p436, %s24, 1
          %s438 = smul.addr %s437, 2
          %s439 = smul.addr %s438, 4
          %s440 = scalar_lea.vmem %s0, %s439
        $region72: #{tpu_custom_call.1} parent=67 // pred_fallthru
          _
        // Predicated region
        $region73: #{tpu_custom_call.1} parent=67 // pred_check
          %p441 = pneg %p70
        $region74: #{tpu_custom_call.1} parent=67 // pred_check_branch
          %443 = sbr.rel (%p441) target = $region76
        $region75: #{tpu_custom_call.1} parent=67 // pred_region
          %p444 = scmp.lt.s32.totalorder %s24, 1
          %s445 = scalar_select %p444, %s24, 1
          %s446 = smul.addr %s445, 8
          %s447 = scalar_lea.vmem %s1, %s446
        $region76: #{tpu_custom_call.1} parent=67 // pred_fallthru
          _
      $region68: #{tpu_custom_call.1} parent=5 // pred_fallthru
        _
      %p448 = scmp.le.s32.totalorder 1, %s24
      %p449 = scmp.lt.s32.totalorder %s24, 3
      %p450 = pnand %p448, %p449
      %p451 = pneg %p450
      // Predicated region
      $region77: #{tpu_custom_call.1} parent=5 // pred_check
        _
      $region78: #{tpu_custom_call.1} parent=5 // pred_check_branch
        %453 = sbr.rel (%p450) target = $region80
      $region79: #{tpu_custom_call.1} parent=5 // pred_region
        %s454 = ssub.s32 %s24, 1
        %p455 = scmp.lt.s32.totalorder %s29, 1
        %s456 = scalar_select %p455, %s29, 1
        %s457 = smul.addr %s456, 2
        %s458 = smul.addr %s457, 4
        %s459 = scalar_lea.vmem %s0, %s458
        %p460 = pneg %p50
        %p461 = pneg %p47
        %p462 = scmp.lt.s32.totalorder %s29, 1
        %s463 = scalar_select %p462, %s29, 1
        %s464 = smul.addr %s463, 8
        %s465 = scalar_lea.vmem %s1, %s464
        %p466 = pneg %p76
        %p467 = pneg %p73
        %p468 = pneg %p97
        %p469 = pneg %p94
        %p470 = pneg %p118
        %p471 = pneg %p115
        %p472 = pneg %p139
        %p473 = pneg %p136
        %p474 = pneg %p160
        %p475 = pneg %p157
        %p476 = pneg %p181
        %p477 = pneg %p178
        %p478 = pneg %p202
        %p479 = pneg %p199
        %p480 = pneg %p223
        %p481 = pneg %p220
        %p482 = pneg %p244
        %p483 = pneg %p241
        %p484 = pneg %p265
        %p485 = pneg %p262
        %p486 = pneg %p286
        %p487 = pneg %p283
        %p488 = pneg %p307
        %p489 = pneg %p304
        %p490 = pneg %p328
        %p491 = pneg %p325
        %p492 = pneg %p349
        %p493 = pneg %p346
        %p494 = pneg %p375
        %p495 = pneg %p372
        %s496 = sand.u32 %s362, 1
        %s497 = scalar_lea.sflag [#allocation5], %s496
        %s498 = sand.u32 %s362, 1
        %s499 = smul.addr %s498, 16
        %s500 = scalar_lea.vmem [#allocation4], %s499
        %p501 = scmp.lt.s32.totalorder %s29, 1
        %s502 = scalar_select %p501, %s29, 1
        %s503 = smul.addr %s502, 2
        %s504 = smul.addr %s503, 4
        %s505 = scalar_lea.vmem %s0, %s504
        %p506 = scmp.lt.s32.totalorder %s29, 1
        %s507 = scalar_select %p506, %s29, 1
        %s508 = smul.addr %s507, 8
        %s509 = scalar_lea.vmem %s1, %s508
        %v511 = vld [vmem:[%s505] sm:$0xff]
        %v512 = vld [vmem:[%s4] sm:$0xf]
        %v514 = vcombine.high %v511, %v511
        %vm516 = vcmask 1043456
        %v517 = vsel %vm516, %v511, 0.0
        %v518 = vsel %vm516, %v514, 0.0
        %v519 = vadd.f32 %v517, %v518
        %520 = vadd.xlane.f32.xlu0 %v519
        %v521 = vpop.xlane.xlu0 %520
        %vm522 = vcmask 31744
        %v524 = vsel %vm522, %v512, 0
        %v527 = vsel %vm516, %v521, 0
        %529 = vmatprep.subr.mxu0 0.0
        %530 = vmatpush1.msra.mxu0 %v527
        %531 = vmatprep.subr.mxu0 0.0
        %532 = vmatpush1.msra.mxu0 0.0
        %533 = vmatprep.subr.mxu0 0.0
        %534 = vmatpush1.msra.mxu0 0.0
        %535 = vmatprep.subr.mxu0 0.0
        %536 = vmatpush1.msra.mxu0 0.0
        %537 = vmatprep.subr.mxu0 0.0
        %538 = vmatpush1.msra.mxu0 0.0
        %539 = vmatprep.subr.mxu0 0.0
        %540 = vmatpush1.msra.mxu0 0.0
        %541 = vmatprep.subr.mxu0 0.0
        %542 = vmatpush1.msra.mxu0 0.0
        %543 = vmatprep.subr.mxu0 0.0
        %544 = vmatpush1.msra.mxu0 0.0
        %545 = vmatprep.subr.mxu0 0.0
        %546 = vmatpush1.msra.mxu0 0.0
        %547 = vmatprep.subr.mxu0 0.0
        %548 = vmatpush1.msra.mxu0 0.0
        %549 = vmatprep.subr.mxu0 0.0
        %550 = vmatpush1.msra.mxu0 0.0
        %551 = vmatprep.subr.mxu0 0.0
        %552 = vmatpush1.msra.mxu0 0.0
        %553 = vmatprep.subr.mxu0 0.0
        %554 = vmatpush1.msra.mxu0 0.0
        %555 = vmatprep.subr.mxu0 0.0
        %556 = vmatpush1.msra.mxu0 0.0
        %557 = vmatprep.subr.mxu0 0.0
        %558 = vmatpush1.msra.mxu0 0.0
        %559 = vmatprep.subr.mxu0 0.0
        %560 = vmatpush1.msra.mxu0 0.0
        %561 = vmatprep.subr.mxu0 0.0
        %562 = vmatpush1.msra.mxu0 0.0
        %563 = vmatprep.subr.mxu0 0.0
        %564 = vmatpush1.msra.mxu0 0.0
        %565 = vmatprep.subr.mxu0 0.0
        %566 = vmatpush1.msra.mxu0 0.0
        %567 = vmatprep.subr.mxu0 0.0
        %568 = vmatpush1.msra.mxu0 0.0
        %569 = vmatprep.subr.mxu0 0.0
        %570 = vmatpush1.msra.mxu0 0.0
        %571 = vmatprep.subr.mxu0 0.0
        %572 = vmatpush1.msra.mxu0 0.0
        %573 = vmatprep.subr.mxu0 0.0
        %574 = vmatpush1.msra.mxu0 0.0
        %575 = vmatprep.subr.mxu0 0.0
        %576 = vmatpush1.msra.mxu0 0.0
        %577 = vmatprep.subr.mxu0 0.0
        %578 = vmatpush1.msra.mxu0 0.0
        %579 = vmatprep.subr.mxu0 0.0
        %580 = vmatpush1.msra.mxu0 0.0
        %581 = vmatprep.subr.mxu0 0.0
        %582 = vmatpush1.msra.mxu0 0.0
        %583 = vmatprep.subr.mxu0 0.0
        %584 = vmatpush1.msra.mxu0 0.0
        %585 = vmatprep.subr.mxu0 0.0
        %586 = vmatpush1.msra.mxu0 0.0
        %587 = vmatprep.subr.mxu0 0.0
        %588 = vmatpush1.msra.mxu0 0.0
        %589 = vmatprep.subr.mxu0 0.0
        %590 = vmatpush1.msra.mxu0 0.0
        %591 = vmatprep.subr.mxu0 0.0
        %592 = vmatpush1.msra.mxu0 0.0
        %593 = vmatprep.mubr.f32.mxu0 0.0
        %594 = vmatmul.mubr.f32.gmra.mrb[0].mxu0 %v524
        %v595 = vpop.f32.mrb[0].mxu0
        %v596 = vadd.f32 0.0, %v595
        %v597 = vpop.f32.mrb[0].mxu0
        %598 = vdwg.mxu0
        %600 = vset.pattern.permute.xlu0 0
        %601 = vperm.xlu0 %600, %v596
        %v602 = vpop.permute.xlu0 %601
        %v604 = vunpack.c.l.s4 839922192
        %v605 = vunpack.c.0.s8 %v604
        %v606 = vlaneseq
        %v607 = vshrl.u32 %v606, 7
        %v608 = vsub.s32 %v605, %v607
        %v609 = vrot.slane %v602, %v608
        %v611 = vsub.f32 %v511, %v609
        %v612 = vmul.f32 %v611, %v611
        %v614 = vcombine.high %v612, %v612
        %v616 = vsel %vm516, %v612, 0.0
        %v617 = vsel %vm516, %v614, 0.0
        %v618 = vadd.f32 %v616, %v617
        %619 = vadd.xlane.f32.xlu0 %v618
        %v620 = vpop.xlane.xlu0 %619
        %v622 = vsel %vm516, %v620, 0
        %624 = vmatprep.subr.mxu0 0.0
        %625 = vmatpush1.msra.mxu0 %v622
        %626 = vmatprep.subr.mxu0 0.0
        %627 = vmatpush1.msra.mxu0 0.0
        %628 = vmatprep.subr.mxu0 0.0
        %629 = vmatpush1.msra.mxu0 0.0
        %630 = vmatprep.subr.mxu0 0.0
        %631 = vmatpush1.msra.mxu0 0.0
        %632 = vmatprep.subr.mxu0 0.0
        %633 = vmatpush1.msra.mxu0 0.0
        %634 = vmatprep.subr.mxu0 0.0
        %635 = vmatpush1.msra.mxu0 0.0
        %636 = vmatprep.subr.mxu0 0.0
        %637 = vmatpush1.msra.mxu0 0.0
        %638 = vmatprep.subr.mxu0 0.0
        %639 = vmatpush1.msra.mxu0 0.0
        %640 = vmatprep.subr.mxu0 0.0
        %641 = vmatpush1.msra.mxu0 0.0
        %642 = vmatprep.subr.mxu0 0.0
        %643 = vmatpush1.msra.mxu0 0.0
        %644 = vmatprep.subr.mxu0 0.0
        %645 = vmatpush1.msra.mxu0 0.0
        %646 = vmatprep.subr.mxu0 0.0
        %647 = vmatpush1.msra.mxu0 0.0
        %648 = vmatprep.subr.mxu0 0.0
        %649 = vmatpush1.msra.mxu0 0.0
        %650 = vmatprep.subr.mxu0 0.0
        %651 = vmatpush1.msra.mxu0 0.0
        %652 = vmatprep.subr.mxu0 0.0
        %653 = vmatpush1.msra.mxu0 0.0
        %654 = vmatprep.subr.mxu0 0.0
        %655 = vmatpush1.msra.mxu0 0.0
        %656 = vmatprep.subr.mxu0 0.0
        %657 = vmatpush1.msra.mxu0 0.0
        %658 = vmatprep.subr.mxu0 0.0
        %659 = vmatpush1.msra.mxu0 0.0
        %660 = vmatprep.subr.mxu0 0.0
        %661 = vmatpush1.msra.mxu0 0.0
        %662 = vmatprep.subr.mxu0 0.0
        %663 = vmatpush1.msra.mxu0 0.0
        %664 = vmatprep.subr.mxu0 0.0
        %665 = vmatpush1.msra.mxu0 0.0
        %666 = vmatprep.subr.mxu0 0.0
        %667 = vmatpush1.msra.mxu0 0.0
        %668 = vmatprep.subr.mxu0 0.0
        %669 = vmatpush1.msra.mxu0 0.0
        %670 = vmatprep.subr.mxu0 0.0
        %671 = vmatpush1.msra.mxu0 0.0
        %672 = vmatprep.subr.mxu0 0.0
        %673 = vmatpush1.msra.mxu0 0.0
        %674 = vmatprep.subr.mxu0 0.0
        %675 = vmatpush1.msra.mxu0 0.0
        %676 = vmatprep.subr.mxu0 0.0
        %677 = vmatpush1.msra.mxu0 0.0
        %678 = vmatprep.subr.mxu0 0.0
        %679 = vmatpush1.msra.mxu0 0.0
        %680 = vmatprep.subr.mxu0 0.0
        %681 = vmatpush1.msra.mxu0 0.0
        %682 = vmatprep.subr.mxu0 0.0
        %683 = vmatpush1.msra.mxu0 0.0
        %684 = vmatprep.subr.mxu0 0.0
        %685 = vmatpush1.msra.mxu0 0.0
        %686 = vmatprep.subr.mxu0 0.0
        %687 = vmatpush1.msra.mxu0 0.0
        %688 = vmatprep.mubr.f32.mxu0 0.0
        %689 = vmatmul.mubr.f32.gmra.mrb[0].mxu0 %v524
        %v690 = vpop.f32.mrb[0].mxu0
        %v691 = vadd.f32 1e-05, %v690
        %v692 = vpop.f32.mrb[0].mxu0
        %693 = vdwg.mxu0
        %v694 = vrsqrt.pop %v691
        %696 = vset.pattern.permute.xlu0 0
        %697 = vperm.xlu0 %696, %v694
        %v698 = vpop.permute.xlu0 %697
        %v700 = vunpack.c.l.s4 839922192
        %v701 = vunpack.c.0.s8 %v700
        %v702 = vlaneseq
        %v703 = vshrl.u32 %v702, 7
        %v704 = vsub.s32 %v701, %v703
        %v705 = vrot.slane %v698, %v704
        %v707 = vmul.f32 %v611, %v705
        %v708 = vld [vmem:[%s2] sm:$0xf]
        %710 = vset.pattern.permute.xlu0 0
        %711 = vperm.xlu0 %710, %v708
        %v712 = vpop.permute.xlu0 %711
        %v714 = vunpack.c.l.s4 839922192
        %v715 = vunpack.c.0.s8 %v714
        %v716 = vlaneseq
        %v717 = vshrl.u32 %v716, 7
        %v718 = vsub.s32 %v715, %v717
        %v719 = vrot.slane %v712, %v718
        %v721 = vmul.f32 %v707, %v719
        %v722 = vld [vmem:[%s3] sm:$0xf]
        %724 = vset.pattern.permute.xlu0 0
        %725 = vperm.xlu0 %724, %v722
        %v726 = vpop.permute.xlu0 %725
        %v728 = vunpack.c.l.s4 839922192
        %v729 = vunpack.c.0.s8 %v728
        %v730 = vlaneseq
        %v731 = vshrl.u32 %v730, 7
        %v732 = vsub.s32 %v729, %v731
        %v733 = vrot.slane %v726, %v732
        %v735 = vadd.f32 %v721, %v733
        %v736 = vxor.u32 %v735, 2147483648
        %v737 = vmul.f32 %v736, 1.442695
        %v738 = vpow.pop %v737
        %v739 = vadd.f32 %v738, 1.0
        %v740 = vrcp.pop %v739
        %v741 = vmul.f32 1.0, %v740
        %v742 = vmul.f32 %v735, %v741
        %743 = vst [vmem:[#allocation2] sm:$0xff] 0.0
        %744 = vst [vmem:[#allocation2 + $0x8] sm:$0xff] 0.0
        %745 = vst [vmem:[#allocation2 + $0x10] sm:$0xff] 0.0
        %746 = vst [vmem:[#allocation2 + $0x18] sm:$0xff] 0.0
        %747 = vst [vmem:[#allocation2 + $0x20] sm:$0xff] 0.0
        %748 = vst [vmem:[#allocation2 + $0x28] sm:$0xff] 0.0
        %749 = vst [vmem:[#allocation2 + $0x30] sm:$0xff] 0.0
        %750 = vst [vmem:[#allocation2 + $0x38] sm:$0xff] 0.0
        %751 = vst [vmem:[#allocation2 + $0x40] sm:$0xff] 0.0
        %752 = vst [vmem:[#allocation2 + $0x48] sm:$0xff] 0.0
        %753 = vst [vmem:[#allocation2 + $0x50] sm:$0xff] 0.0
        %754 = vst [vmem:[#allocation2 + $0x58] sm:$0xff] 0.0
        %755 = vst [vmem:[#allocation2 + $0x60] sm:$0xff] 0.0
        %756 = vst [vmem:[#allocation2 + $0x68] sm:$0xff] 0.0
        %757 = vst [vmem:[#allocation2 + $0x70] sm:$0xff] 0.0
        %758 = vst [vmem:[#allocation2 + $0x78] sm:$0xff] 0.0
        %759 = vst [vmem:[#allocation2 + $0x80] sm:$0xff] 0.0
        %760 = vst [vmem:[#allocation2 + $0x88] sm:$0xff] 0.0
        %v762 = vcombine.high %v742, %v742
        %764 = vrot.lane.b32.xlu0 %v742, 17
        %v765 = vpop.permute.xlu0 %764
        %766 = vrot.lane.b32.xlu0 %v762, 17
        %v767 = vpop.permute.xlu0 %766
        %v768 = vlaneseq
        %v769 = vand.u32 %v768, 127
        %vm770 = vcmp.lt.s32.totalorder %v769, 17
        %v771 = vsel %vm770, %v765, %v767
        %v772 = vsel %vm770, %v767, %v765
        %v773 = vld [vmem:[%s14] sm:$0x3]
        %v775 = vlaneseq
        %v776 = vshrl.u32 %v775, 7
        %v777 = vsub.s32 0, %v776
        %v778 = vrot.slane %v773, %v777
        %v779 = vlaneseq
        %v780 = vshrl.u32 %v779, 7
        %v781 = vsub.s32 1, %v780
        %v782 = vrot.slane %v773, %v781
        %v785 = vmul.f32 %v772, %v778
        %v786 = vmul.f32 %v771, %v782
        %787 = vst [vmem:[#allocation2] sm:$0xf] %v785
        %788 = vst [vmem:[#allocation2 + $0x8] sm:$0xf] %v786
        %789 = vrot.lane.b32.xlu0 %v742, 16
        %v790 = vpop.permute.xlu0 %789
        %791 = vrot.lane.b32.xlu0 %v762, 16
        %v792 = vpop.permute.xlu0 %791
        %vm793 = vcmp.lt.s32.totalorder %v769, 16
        %v794 = vsel %vm793, %v790, %v792
        %v795 = vsel %vm793, %v792, %v790
        %s796 = scalar_lea.vmem %s14, 2
        %v797 = vld [vmem:[%s796] sm:$0x3]
        %v799 = vlaneseq
        %v800 = vshrl.u32 %v799, 7
        %v801 = vsub.s32 0, %v800
        %v802 = vrot.slane %v797, %v801
        %v803 = vlaneseq
        %v804 = vshrl.u32 %v803, 7
        %v805 = vsub.s32 1, %v804
        %v806 = vrot.slane %v797, %v805
        %v809 = vmul.f32 %v795, %v802
        %v810 = vmul.f32 %v794, %v806
        %811 = vst [vmem:[#allocation2 + $0x10] sm:$0xf] %v809
        %812 = vst [vmem:[#allocation2 + $0x18] sm:$0xf] %v810
        %813 = vrot.lane.b32.xlu0 %v742, 15
        %v814 = vpop.permute.xlu0 %813
        %815 = vrot.lane.b32.xlu0 %v762, 15
        %v816 = vpop.permute.xlu0 %815
        %vm817 = vcmp.lt.s32.totalorder %v769, 15
        %v818 = vsel %vm817, %v814, %v816
        %v819 = vsel %vm817, %v816, %v814
        %s820 = scalar_lea.vmem %s14, 4
        %v821 = vld [vmem:[%s820] sm:$0x3]
        %v823 = vlaneseq
        %v824 = vshrl.u32 %v823, 7
        %v825 = vsub.s32 0, %v824
        %v826 = vrot.slane %v821, %v825
        %v827 = vlaneseq
        %v828 = vshrl.u32 %v827, 7
        %v829 = vsub.s32 1, %v828
        %v830 = vrot.slane %v821, %v829
        %v833 = vmul.f32 %v819, %v826
        %v834 = vmul.f32 %v818, %v830
        %835 = vst [vmem:[#allocation2 + $0x20] sm:$0xf] %v833
        %836 = vst [vmem:[#allocation2 + $0x28] sm:$0xf] %v834
        %837 = vrot.lane.b32.xlu0 %v742, 1
        %v838 = vpop.permute.xlu0 %837
        %839 = vrot.lane.b32.xlu0 %v762, 1
        %v840 = vpop.permute.xlu0 %839
        %vm841 = vcmp.lt.s32.totalorder %v769, 1
        %v842 = vsel %vm841, %v838, %v840
        %v843 = vsel %vm841, %v840, %v838
        %s844 = scalar_lea.vmem %s14, 6
        %v845 = vld [vmem:[%s844] sm:$0x3]
        %v847 = vlaneseq
        %v848 = vshrl.u32 %v847, 7
        %v849 = vsub.s32 0, %v848
        %v850 = vrot.slane %v845, %v849
        %v851 = vlaneseq
        %v852 = vshrl.u32 %v851, 7
        %v853 = vsub.s32 1, %v852
        %v854 = vrot.slane %v845, %v853
        %v857 = vmul.f32 %v843, %v850
        %v858 = vmul.f32 %v842, %v854
        %859 = vst [vmem:[#allocation2 + $0x30] sm:$0xf] %v857
        %860 = vst [vmem:[#allocation2 + $0x38] sm:$0xf] %v858
        %s861 = scalar_lea.vmem %s14, 8
        %v862 = vld [vmem:[%s861] sm:$0x3]
        %v864 = vlaneseq
        %v865 = vshrl.u32 %v864, 7
        %v866 = vsub.s32 0, %v865
        %v867 = vrot.slane %v862, %v866
        %v868 = vlaneseq
        %v869 = vshrl.u32 %v868, 7
        %v870 = vsub.s32 1, %v869
        %v871 = vrot.slane %v862, %v870
        %v872 = vcombine.low %v867, %v871
        %v874 = vmul.f32 %v742, %v872
        %v876 = vcombine.high %v874, %v874
        %878 = vst [vmem:[#allocation2 + $0x40] sm:$0xf] %v874
        %879 = vst [vmem:[#allocation2 + $0x48] sm:$0xf] %v876
        %880 = vrot.lane.b32.xlu0 %v742, 127
        %v881 = vpop.permute.xlu0 %880
        %882 = vrot.lane.b32.xlu0 %v762, 127
        %v883 = vpop.permute.xlu0 %882
        %vm884 = vcmp.lt.s32.totalorder %v769, 127
        %v885 = vsel %vm884, %v881, %v883
        %v886 = vsel %vm884, %v883, %v881
        %s887 = scalar_lea.vmem %s14, 10
        %v888 = vld [vmem:[%s887] sm:$0x3]
        %v890 = vlaneseq
        %v891 = vshrl.u32 %v890, 7
        %v892 = vsub.s32 0, %v891
        %v893 = vrot.slane %v888, %v892
        %v894 = vlaneseq
        %v895 = vshrl.u32 %v894, 7
        %v896 = vsub.s32 1, %v895
        %v897 = vrot.slane %v888, %v896
        %v900 = vmul.f32 %v885, %v893
        %v901 = vmul.f32 %v886, %v897
        %902 = vst [vmem:[#allocation2 + $0x50] sm:$0xf] %v900
        %903 = vst [vmem:[#allocation2 + $0x58] sm:$0xf] %v901
        %904 = vrot.lane.b32.xlu0 %v742, 113
        %v905 = vpop.permute.xlu0 %904
        %906 = vrot.lane.b32.xlu0 %v762, 113
        %v907 = vpop.permute.xlu0 %906
        %vm908 = vcmp.lt.s32.totalorder %v769, 113
        %v909 = vsel %vm908, %v905, %v907
        %v910 = vsel %vm908, %v907, %v905
        %s911 = scalar_lea.vmem %s14, 12
        %v912 = vld [vmem:[%s911] sm:$0x3]
        %v914 = vlaneseq
        %v915 = vshrl.u32 %v914, 7
        %v916 = vsub.s32 0, %v915
        %v917 = vrot.slane %v912, %v916
        %v918 = vlaneseq
        %v919 = vshrl.u32 %v918, 7
        %v920 = vsub.s32 1, %v919
        %v921 = vrot.slane %v912, %v920
        %v924 = vmul.f32 %v909, %v917
        %v925 = vmul.f32 %v910, %v921
        %926 = vst [vmem:[#allocation2 + $0x60] sm:$0xf] %v924
        %927 = vst [vmem:[#allocation2 + $0x68] sm:$0xf] %v925
        %928 = vrot.lane.b32.xlu0 %v742, 112
        %v929 = vpop.permute.xlu0 %928
        %930 = vrot.lane.b32.xlu0 %v762, 112
        %v931 = vpop.permute.xlu0 %930
        %vm932 = vcmp.lt.s32.totalorder %v769, 112
        %v933 = vsel %vm932, %v929, %v931
        %v934 = vsel %vm932, %v931, %v929
        %s935 = scalar_lea.vmem %s14, 14
        %v936 = vld [vmem:[%s935] sm:$0x3]
        %v938 = vlaneseq
        %v939 = vshrl.u32 %v938, 7
        %v940 = vsub.s32 0, %v939
        %v941 = vrot.slane %v936, %v940
        %v942 = vlaneseq
        %v943 = vshrl.u32 %v942, 7
        %v944 = vsub.s32 1, %v943
        %v945 = vrot.slane %v936, %v944
        %v948 = vmul.f32 %v933, %v941
        %v949 = vmul.f32 %v934, %v945
        %950 = vst [vmem:[#allocation2 + $0x70] sm:$0xf] %v948
        %951 = vst [vmem:[#allocation2 + $0x78] sm:$0xf] %v949
        %952 = vrot.lane.b32.xlu0 %v742, 111
        %v953 = vpop.permute.xlu0 %952
        %954 = vrot.lane.b32.xlu0 %v762, 111
        %v955 = vpop.permute.xlu0 %954
        %vm956 = vcmp.lt.s32.totalorder %v769, 111
        %v957 = vsel %vm956, %v953, %v955
        %v958 = vsel %vm956, %v955, %v953
        %s959 = scalar_lea.vmem %s14, 16
        %v960 = vld [vmem:[%s959] sm:$0x3]
        %v962 = vlaneseq
        %v963 = vshrl.u32 %v962, 7
        %v964 = vsub.s32 0, %v963
        %v965 = vrot.slane %v960, %v964
        %v966 = vlaneseq
        %v967 = vshrl.u32 %v966, 7
        %v968 = vsub.s32 1, %v967
        %v969 = vrot.slane %v960, %v968
        %v972 = vmul.f32 %v957, %v965
        %v973 = vmul.f32 %v958, %v969
        %974 = vst [vmem:[#allocation2 + $0x80] sm:$0xf] %v972
        %975 = vst [vmem:[#allocation2 + $0x88] sm:$0xf] %v973
        %v976 = vld [vmem:[#allocation2] sm:$0xff]
        %v977 = vld [vmem:[#allocation2 + $0x8] sm:$0xff]
        %v978 = vld [vmem:[#allocation2 + $0x10] sm:$0xff]
        %v979 = vld [vmem:[#allocation2 + $0x18] sm:$0xff]
        %v980 = vld [vmem:[#allocation2 + $0x20] sm:$0xff]
        %v981 = vld [vmem:[#allocation2 + $0x28] sm:$0xff]
        %v982 = vld [vmem:[#allocation2 + $0x30] sm:$0xff]
        %v983 = vld [vmem:[#allocation2 + $0x38] sm:$0xff]
        %v984 = vld [vmem:[#allocation2 + $0x40] sm:$0xff]
        %v985 = vld [vmem:[#allocation2 + $0x48] sm:$0xff]
        %v986 = vld [vmem:[#allocation2 + $0x50] sm:$0xff]
        %v987 = vld [vmem:[#allocation2 + $0x58] sm:$0xff]
        %v988 = vld [vmem:[#allocation2 + $0x60] sm:$0xff]
        %v989 = vld [vmem:[#allocation2 + $0x68] sm:$0xff]
        %v990 = vld [vmem:[#allocation2 + $0x70] sm:$0xff]
        %v991 = vld [vmem:[#allocation2 + $0x78] sm:$0xff]
        %v992 = vld [vmem:[#allocation2 + $0x80] sm:$0xff]
        %v993 = vld [vmem:[#allocation2 + $0x88] sm:$0xff]
        %v994 = vpack.c.bf16 %v978, %v976
        %v995 = vpack.c.bf16 %v979, %v977
        %v996 = vpack.c.bf16 %v982, %v980
        %v997 = vpack.c.bf16 %v983, %v981
        %v998 = vpack.c.bf16 %v986, %v984
        %v999 = vpack.c.bf16 %v987, %v985
        %v1000 = vpack.c.bf16 %v990, %v988
        %v1001 = vpack.c.bf16 %v991, %v989
        %v1002 = vpack.c.bf16 %v992, %v992
        %v1003 = vpack.c.bf16 %v993, %v993
        %v1004 = vld [vmem:[%s5] sm:$0xf]
        %v1005 = vld [vmem:[%s6] sm:$0xff]
        %1007 = vset.pattern.permute.xlu0 0
        %1008 = vperm.xlu0 %1007, %v1005
        %v1009 = vpop.permute.xlu0 %1008
        %vm1011 = vcmask 588800
        %v1013 = vsel %vm1011, %v1004, 0
        %v1016 = vsel %vm516, %v1002, 0
        %v1019 = vsel %vm516, %v1003, 0
        %1021 = vmatprep.subr.bf16.mxu0 %v995
        %1022 = vmatpush1.bf16.msra.mxu0 %v994
        %1023 = vmatprep.subr.bf16.mxu0 %v997
        %1024 = vmatpush1.bf16.msra.mxu0 %v996
        %1025 = vmatprep.subr.bf16.mxu0 %v999
        %1026 = vmatpush1.bf16.msra.mxu0 %v998
        %1027 = vmatprep.subr.bf16.mxu0 %v1001
        %1028 = vmatpush1.bf16.msra.mxu0 %v1000
        %1029 = vmatprep.subr.bf16.mxu0 %v1019
        %1030 = vmatpush1.bf16.msra.mxu0 %v1016
        %1031 = vmatprep.subr.bf16.mxu0 0
        %1032 = vmatpush1.bf16.msra.mxu0 0
        %1033 = vmatprep.subr.bf16.mxu0 0
        %1034 = vmatpush1.bf16.msra.mxu0 0
        %1035 = vmatprep.subr.bf16.mxu0 0
        %1036 = vmatpush1.bf16.msra.mxu0 0
        %1037 = vmatprep.subr.bf16.mxu0 0
        %1038 = vmatpush1.bf16.msra.mxu0 0
        %1039 = vmatprep.subr.bf16.mxu0 0
        %1040 = vmatpush1.bf16.msra.mxu0 0
        %1041 = vmatprep.subr.bf16.mxu0 0
        %1042 = vmatpush1.bf16.msra.mxu0 0
        %1043 = vmatprep.subr.bf16.mxu0 0
        %1044 = vmatpush1.bf16.msra.mxu0 0
        %1045 = vmatprep.subr.bf16.mxu0 0
        %1046 = vmatpush1.bf16.msra.mxu0 0
        %1047 = vmatprep.subr.bf16.mxu0 0
        %1048 = vmatpush1.bf16.msra.mxu0 0
        %1049 = vmatprep.subr.bf16.mxu0 0
        %1050 = vmatpush1.bf16.msra.mxu0 0
        %1051 = vmatprep.subr.bf16.mxu0 0
        %1052 = vmatpush1.bf16.msra.mxu0 0
        %1053 = vmatprep.mubr.bf16.mxu0 0
        %1054 = vmatmul.mubr.bf16.gmra.mrb[0].mxu0 %v1013
        %v1055 = vpop.f32.mrb[0].mxu0
        %v1056 = vadd.f32 %v1009, %v1055
        %v1057 = vpop.f32.mrb[0].mxu0
        %v1058 = vadd.f32 %v1009, %v1057
        %v1059 = vpop.f32.mrb[0].mxu0
        %v1060 = vpop.f32.mrb[0].mxu0
        %1061 = vdwg.mxu0
        %v1062 = vld [vmem:[%s509] sm:$0xff]
        %1064 = vset.pattern.permute.xlu0 0
        %1065 = vperm.xlu0 %1064, %v1062
        %v1066 = vpop.permute.xlu0 %1065
        %v1068 = vadd.f32 %v1056, %v1066
        %v1069 = vadd.f32 %v1058, %v1066
        %v1070 = vld [vmem:[%s9] sm:$0xff]
        %v1071 = vadd.f32 %v1068, %v1069
        %1072 = vadd.xlane.f32.xlu0 %v1071
        %v1073 = vpop.xlane.xlu0 %1072
        %vm1074 = vcmask 64512
        %v1076 = vsel %vm1074, %v1070, 0
        %1078 = vmatprep.subr.mxu0 0.0
        %1079 = vmatpush1.msra.mxu0 %v1073
        %1080 = vmatprep.subr.mxu0 0.0
        %1081 = vmatpush1.msra.mxu0 0.0
        %1082 = vmatprep.subr.mxu0 0.0
        %1083 = vmatpush1.msra.mxu0 0.0
        %1084 = vmatprep.subr.mxu0 0.0
        %1085 = vmatpush1.msra.mxu0 0.0
        %1086 = vmatprep.subr.mxu0 0.0
        %1087 = vmatpush1.msra.mxu0 0.0
        %1088 = vmatprep.subr.mxu0 0.0
        %1089 = vmatpush1.msra.mxu0 0.0
        %1090 = vmatprep.subr.mxu0 0.0
        %1091 = vmatpush1.msra.mxu0 0.0
        %1092 = vmatprep.subr.mxu0 0.0
        %1093 = vmatpush1.msra.mxu0 0.0
        %1094 = vmatprep.subr.mxu0 0.0
        %1095 = vmatpush1.msra.mxu0 0.0
        %1096 = vmatprep.subr.mxu0 0.0
        %1097 = vmatpush1.msra.mxu0 0.0
        %1098 = vmatprep.subr.mxu0 0.0
        %1099 = vmatpush1.msra.mxu0 0.0
        %1100 = vmatprep.subr.mxu0 0.0
        %1101 = vmatpush1.msra.mxu0 0.0
        %1102 = vmatprep.subr.mxu0 0.0
        %1103 = vmatpush1.msra.mxu0 0.0
        %1104 = vmatprep.subr.mxu0 0.0
        %1105 = vmatpush1.msra.mxu0 0.0
        %1106 = vmatprep.subr.mxu0 0.0
        %1107 = vmatpush1.msra.mxu0 0.0
        %1108 = vmatprep.subr.mxu0 0.0
        %1109 = vmatpush1.msra.mxu0 0.0
        %1110 = vmatprep.subr.mxu0 0.0
        %1111 = vmatpush1.msra.mxu0 0.0
        %1112 = vmatprep.subr.mxu0 0.0
        %1113 = vmatpush1.msra.mxu0 0.0
        %1114 = vmatprep.subr.mxu0 0.0
        %1115 = vmatpush1.msra.mxu0 0.0
        %1116 = vmatprep.subr.mxu0 0.0
        %1117 = vmatpush1.msra.mxu0 0.0
        %1118 = vmatprep.subr.mxu0 0.0
        %1119 = vmatpush1.msra.mxu0 0.0
        %1120 = vmatprep.subr.mxu0 0.0
        %1121 = vmatpush1.msra.mxu0 0.0
        %1122 = vmatprep.subr.mxu0 0.0
        %1123 = vmatpush1.msra.mxu0 0.0
        %1124 = vmatprep.subr.mxu0 0.0
        %1125 = vmatpush1.msra.mxu0 0.0
        %1126 = vmatprep.subr.mxu0 0.0
        %1127 = vmatpush1.msra.mxu0 0.0
        %1128 = vmatprep.subr.mxu0 0.0
        %1129 = vmatpush1.msra.mxu0 0.0
        %1130 = vmatprep.subr.mxu0 0.0
        %1131 = vmatpush1.msra.mxu0 0.0
        %1132 = vmatprep.subr.mxu0 0.0
        %1133 = vmatpush1.msra.mxu0 0.0
        %1134 = vmatprep.subr.mxu0 0.0
        %1135 = vmatpush1.msra.mxu0 0.0
        %1136 = vmatprep.subr.mxu0 0.0
        %1137 = vmatpush1.msra.mxu0 0.0
        %1138 = vmatprep.subr.mxu0 0.0
        %1139 = vmatpush1.msra.mxu0 0.0
        %1140 = vmatprep.subr.mxu0 0.0
        %1141 = vmatpush1.msra.mxu0 0.0
        %1142 = vmatprep.mubr.f32.mxu0 0.0
        %1143 = vmatmul.mubr.f32.gmra.mrb[0].mxu0 %v1076
        %v1144 = vpop.f32.mrb[0].mxu0
        %v1145 = vadd.f32 0.0, %v1144
        %v1146 = vpop.f32.mrb[0].mxu0
        %1147 = vdwg.mxu0
        %1149 = vset.pattern.permute.xlu0 0
        %1150 = vperm.xlu0 %1149, %v1145
        %v1151 = vpop.permute.xlu0 %1150
        %v1153 = vsub.f32 %v1068, %v1151
        %v1154 = vsub.f32 %v1069, %v1151
        %v1155 = vmul.f32 %v1153, %v1153
        %v1156 = vmul.f32 %v1154, %v1154
        %v1157 = vadd.f32 %v1155, %v1156
        %1158 = vadd.xlane.f32.xlu0 %v1157
        %v1159 = vpop.xlane.xlu0 %1158
        %1160 = vmatprep.subr.mxu0 0.0
        %1161 = vmatpush1.msra.mxu0 %v1159
        %1162 = vmatprep.subr.mxu0 0.0
        %1163 = vmatpush1.msra.mxu0 0.0
        %1164 = vmatprep.subr.mxu0 0.0
        %1165 = vmatpush1.msra.mxu0 0.0
        %1166 = vmatprep.subr.mxu0 0.0
        %1167 = vmatpush1.msra.mxu0 0.0
        %1168 = vmatprep.subr.mxu0 0.0
        %1169 = vmatpush1.msra.mxu0 0.0
        %1170 = vmatprep.subr.mxu0 0.0
        %1171 = vmatpush1.msra.mxu0 0.0
        %1172 = vmatprep.subr.mxu0 0.0
        %1173 = vmatpush1.msra.mxu0 0.0
        %1174 = vmatprep.subr.mxu0 0.0
        %1175 = vmatpush1.msra.mxu0 0.0
        %1176 = vmatprep.subr.mxu0 0.0
        %1177 = vmatpush1.msra.mxu0 0.0
        %1178 = vmatprep.subr.mxu0 0.0
        %1179 = vmatpush1.msra.mxu0 0.0
        %1180 = vmatprep.subr.mxu0 0.0
        %1181 = vmatpush1.msra.mxu0 0.0
        %1182 = vmatprep.subr.mxu0 0.0
        %1183 = vmatpush1.msra.mxu0 0.0
        %1184 = vmatprep.subr.mxu0 0.0
        %1185 = vmatpush1.msra.mxu0 0.0
        %1186 = vmatprep.subr.mxu0 0.0
        %1187 = vmatpush1.msra.mxu0 0.0
        %1188 = vmatprep.subr.mxu0 0.0
        %1189 = vmatpush1.msra.mxu0 0.0
        %1190 = vmatprep.subr.mxu0 0.0
        %1191 = vmatpush1.msra.mxu0 0.0
        %1192 = vmatprep.subr.mxu0 0.0
        %1193 = vmatpush1.msra.mxu0 0.0
        %1194 = vmatprep.subr.mxu0 0.0
        %1195 = vmatpush1.msra.mxu0 0.0
        %1196 = vmatprep.subr.mxu0 0.0
        %1197 = vmatpush1.msra.mxu0 0.0
        %1198 = vmatprep.subr.mxu0 0.0
        %1199 = vmatpush1.msra.mxu0 0.0
        %1200 = vmatprep.subr.mxu0 0.0
        %1201 = vmatpush1.msra.mxu0 0.0
        %1202 = vmatprep.subr.mxu0 0.0
        %1203 = vmatpush1.msra.mxu0 0.0
        %1204 = vmatprep.subr.mxu0 0.0
        %1205 = vmatpush1.msra.mxu0 0.0
        %1206 = vmatprep.subr.mxu0 0.0
        %1207 = vmatpush1.msra.mxu0 0.0
        %1208 = vmatprep.subr.mxu0 0.0
        %1209 = vmatpush1.msra.mxu0 0.0
        %1210 = vmatprep.subr.mxu0 0.0
        %1211 = vmatpush1.msra.mxu0 0.0
        %1212 = vmatprep.subr.mxu0 0.0
        %1213 = vmatpush1.msra.mxu0 0.0
        %1214 = vmatprep.subr.mxu0 0.0
        %1215 = vmatpush1.msra.mxu0 0.0
        %1216 = vmatprep.subr.mxu0 0.0
        %1217 = vmatpush1.msra.mxu0 0.0
        %1218 = vmatprep.subr.mxu0 0.0
        %1219 = vmatpush1.msra.mxu0 0.0
        %1220 = vmatprep.subr.mxu0 0.0
        %1221 = vmatpush1.msra.mxu0 0.0
        %1222 = vmatprep.subr.mxu0 0.0
        %1223 = vmatpush1.msra.mxu0 0.0
        %1224 = vmatprep.mubr.f32.mxu0 0.0
        %1225 = vmatmul.mubr.f32.gmra.mrb[0].mxu0 %v1076
        %v1226 = vpop.f32.mrb[0].mxu0
        %v1227 = vadd.f32 1e-05, %v1226
        %v1228 = vpop.f32.mrb[0].mxu0
        %1229 = vdwg.mxu0
        %v1230 = vrsqrt.pop %v1227
        %1232 = vset.pattern.permute.xlu0 0
        %1233 = vperm.xlu0 %1232, %v1230
        %v1234 = vpop.permute.xlu0 %1233
        %v1236 = vmul.f32 %v1153, %v1234
        %v1237 = vmul.f32 %v1154, %v1234
        %v1238 = vld [vmem:[%s7] sm:$0xff]
        %1240 = vset.pattern.permute.xlu0 0
        %1241 = vperm.xlu0 %1240, %v1238
        %v1242 = vpop.permute.xlu0 %1241
        %v1244 = vmul.f32 %v1236, %v1242
        %v1245 = vmul.f32 %v1237, %v1242
        %v1246 = vld [vmem:[%s8] sm:$0xff]
        %1248 = vset.pattern.permute.xlu0 0
        %1249 = vperm.xlu0 %1248, %v1246
        %v1250 = vpop.permute.xlu0 %1249
        %v1252 = vadd.f32 %v1244, %v1250
        %v1253 = vadd.f32 %v1245, %v1250
        %v1254 = vxor.u32 %v1252, 2147483648
        %v1255 = vxor.u32 %v1253, 2147483648
        %v1256 = vmul.f32 %v1254, 1.442695
        %v1257 = vpow.pop %v1256
        %v1258 = vmul.f32 %v1255, 1.442695
        %v1259 = vpow.pop %v1258
        %v1260 = vadd.f32 %v1257, 1.0
        %v1261 = vadd.f32 %v1259, 1.0
        %v1262 = vrcp.pop %v1260
        %v1263 = vmul.f32 1.0, %v1262
        %v1264 = vrcp.pop %v1261
        %v1265 = vmul.f32 1.0, %v1264
        %v1266 = vmul.f32 %v1252, %v1263
        %v1267 = vmul.f32 %v1253, %v1265
        %1268 = vrot.lane.b32.xlu0 %v1266, 17
        %v1269 = vpop.permute.xlu0 %1268
        %1270 = vrot.lane.b32.xlu0 %v1267, 17
        %v1271 = vpop.permute.xlu0 %1270
        %v1272 = vsel %vm770, %v1269, %v1271
        %v1273 = vsel %vm770, %v1271, %v1269
        %v1274 = vld [vmem:[%s14] sm:$0x3]
        %v1276 = vlaneseq
        %v1277 = vshrl.u32 %v1276, 7
        %v1278 = vsub.s32 0, %v1277
        %v1279 = vrot.slane %v1274, %v1278
        %v1280 = vlaneseq
        %v1281 = vshrl.u32 %v1280, 7
        %v1282 = vsub.s32 1, %v1281
        %v1283 = vrot.slane %v1274, %v1282
        %v1286 = vmul.f32 %v1273, %v1279
        %v1287 = vmul.f32 %v1272, %v1283
        %1288 = vst [vmem:[#allocation3] sm:$0xff] %v1286
        %1289 = vst [vmem:[#allocation3 + $0x8] sm:$0xff] %v1287
        %1290 = vrot.lane.b32.xlu0 %v1266, 16
        %v1291 = vpop.permute.xlu0 %1290
        %1292 = vrot.lane.b32.xlu0 %v1267, 16
        %v1293 = vpop.permute.xlu0 %1292
        %v1294 = vsel %vm793, %v1291, %v1293
        %v1295 = vsel %vm793, %v1293, %v1291
        %v1296 = vld [vmem:[%s796] sm:$0x3]
        %v1298 = vlaneseq
        %v1299 = vshrl.u32 %v1298, 7
        %v1300 = vsub.s32 0, %v1299
        %v1301 = vrot.slane %v1296, %v1300
        %v1302 = vlaneseq
        %v1303 = vshrl.u32 %v1302, 7
        %v1304 = vsub.s32 1, %v1303
        %v1305 = vrot.slane %v1296, %v1304
        %v1308 = vmul.f32 %v1295, %v1301
        %v1309 = vmul.f32 %v1294, %v1305
        %1310 = vst [vmem:[#allocation3 + $0x10] sm:$0xff] %v1308
        %1311 = vst [vmem:[#allocation3 + $0x18] sm:$0xff] %v1309
        %1312 = vrot.lane.b32.xlu0 %v1266, 15
        %v1313 = vpop.permute.xlu0 %1312
        %1314 = vrot.lane.b32.xlu0 %v1267, 15
        %v1315 = vpop.permute.xlu0 %1314
        %v1316 = vsel %vm817, %v1313, %v1315
        %v1317 = vsel %vm817, %v1315, %v1313
        %v1318 = vld [vmem:[%s820] sm:$0x3]
        %v1320 = vlaneseq
        %v1321 = vshrl.u32 %v1320, 7
        %v1322 = vsub.s32 0, %v1321
        %v1323 = vrot.slane %v1318, %v1322
        %v1324 = vlaneseq
        %v1325 = vshrl.u32 %v1324, 7
        %v1326 = vsub.s32 1, %v1325
        %v1327 = vrot.slane %v1318, %v1326
        %v1330 = vmul.f32 %v1317, %v1323
        %v1331 = vmul.f32 %v1316, %v1327
        %1332 = vst [vmem:[#allocation3 + $0x20] sm:$0xff] %v1330
        %1333 = vst [vmem:[#allocation3 + $0x28] sm:$0xff] %v1331
        %1334 = vrot.lane.b32.xlu0 %v1266, 1
        %v1335 = vpop.permute.xlu0 %1334
        %1336 = vrot.lane.b32.xlu0 %v1267, 1
        %v1337 = vpop.permute.xlu0 %1336
        %v1338 = vsel %vm841, %v1335, %v1337
        %v1339 = vsel %vm841, %v1337, %v1335
        %v1340 = vld [vmem:[%s844] sm:$0x3]
        %v1342 = vlaneseq
        %v1343 = vshrl.u32 %v1342, 7
        %v1344 = vsub.s32 0, %v1343
        %v1345 = vrot.slane %v1340, %v1344
        %v1346 = vlaneseq
        %v1347 = vshrl.u32 %v1346, 7
        %v1348 = vsub.s32 1, %v1347
        %v1349 = vrot.slane %v1340, %v1348
        %v1352 = vmul.f32 %v1339, %v1345
        %v1353 = vmul.f32 %v1338, %v1349
        %1354 = vst [vmem:[#allocation3 + $0x30] sm:$0xff] %v1352
        %1355 = vst [vmem:[#allocation3 + $0x38] sm:$0xff] %v1353
        %v1356 = vld [vmem:[%s861] sm:$0x3]
        %v1358 = vlaneseq
        %v1359 = vshrl.u32 %v1358, 7
        %v1360 = vsub.s32 0, %v1359
        %v1361 = vrot.slane %v1356, %v1360
        %v1362 = vlaneseq
        %v1363 = vshrl.u32 %v1362, 7
        %v1364 = vsub.s32 1, %v1363
        %v1365 = vrot.slane %v1356, %v1364
        %v1368 = vmul.f32 %v1266, %v1361
        %v1369 = vmul.f32 %v1267, %v1365
        %1370 = vst [vmem:[#allocation3 + $0x40] sm:$0xff] %v1368
        %1371 = vst [vmem:[#allocation3 + $0x48] sm:$0xff] %v1369
        %1372 = vrot.lane.b32.xlu0 %v1266, 127
        %v1373 = vpop.permute.xlu0 %1372
        %1374 = vrot.lane.b32.xlu0 %v1267, 127
        %v1375 = vpop.permute.xlu0 %1374
        %v1376 = vsel %vm884, %v1373, %v1375
        %v1377 = vsel %vm884, %v1375, %v1373
        %v1378 = vld [vmem:[%s887] sm:$0x3]
        %v1380 = vlaneseq
        %v1381 = vshrl.u32 %v1380, 7
        %v1382 = vsub.s32 0, %v1381
        %v1383 = vrot.slane %v1378, %v1382
        %v1384 = vlaneseq
        %v1385 = vshrl.u32 %v1384, 7
        %v1386 = vsub.s32 1, %v1385
        %v1387 = vrot.slane %v1378, %v1386
        %v1390 = vmul.f32 %v1376, %v1383
        %v1391 = vmul.f32 %v1377, %v1387
        %1392 = vst [vmem:[#allocation3 + $0x50] sm:$0xff] %v1390
        %1393 = vst [vmem:[#allocation3 + $0x58] sm:$0xff] %v1391
        %1394 = vrot.lane.b32.xlu0 %v1266, 113
        %v1395 = vpop.permute.xlu0 %1394
        %1396 = vrot.lane.b32.xlu0 %v1267, 113
        %v1397 = vpop.permute.xlu0 %1396
        %v1398 = vsel %vm908, %v1395, %v1397
        %v1399 = vsel %vm908, %v1397, %v1395
        %v1400 = vld [vmem:[%s911] sm:$0x3]
        %v1402 = vlaneseq
        %v1403 = vshrl.u32 %v1402, 7
        %v1404 = vsub.s32 0, %v1403
        %v1405 = vrot.slane %v1400, %v1404
        %v1406 = vlaneseq
        %v1407 = vshrl.u32 %v1406, 7
        %v1408 = vsub.s32 1, %v1407
        %v1409 = vrot.slane %v1400, %v1408
        %v1412 = vmul.f32 %v1398, %v1405
        %v1413 = vmul.f32 %v1399, %v1409
        %1414 = vst [vmem:[#allocation3 + $0x60] sm:$0xff] %v1412
        %1415 = vst [vmem:[#allocation3 + $0x68] sm:$0xff] %v1413
        %1416 = vrot.lane.b32.xlu0 %v1266, 112
        %v1417 = vpop.permute.xlu0 %1416
        %1418 = vrot.lane.b32.xlu0 %v1267, 112
        %v1419 = vpop.permute.xlu0 %1418
        %v1420 = vsel %vm932, %v1417, %v1419
        %v1421 = vsel %vm932, %v1419, %v1417
        %v1422 = vld [vmem:[%s935] sm:$0x3]
        %v1424 = vlaneseq
        %v1425 = vshrl.u32 %v1424, 7
        %v1426 = vsub.s32 0, %v1425
        %v1427 = vrot.slane %v1422, %v1426
        %v1428 = vlaneseq
        %v1429 = vshrl.u32 %v1428, 7
        %v1430 = vsub.s32 1, %v1429
        %v1431 = vrot.slane %v1422, %v1430
        %v1434 = vmul.f32 %v1420, %v1427
        %v1435 = vmul.f32 %v1421, %v1431
        %1436 = vst [vmem:[#allocation3 + $0x70] sm:$0xff] %v1434
        %1437 = vst [vmem:[#allocation3 + $0x78] sm:$0xff] %v1435
        %1438 = vrot.lane.b32.xlu0 %v1266, 111
        %v1439 = vpop.permute.xlu0 %1438
        %1440 = vrot.lane.b32.xlu0 %v1267, 111
        %v1441 = vpop.permute.xlu0 %1440
        %v1442 = vsel %vm956, %v1439, %v1441
        %v1443 = vsel %vm956, %v1441, %v1439
        %v1444 = vld [vmem:[%s959] sm:$0x3]
        %v1446 = vlaneseq
        %v1447 = vshrl.u32 %v1446, 7
        %v1448 = vsub.s32 0, %v1447
        %v1449 = vrot.slane %v1444, %v1448
        %v1450 = vlaneseq
        %v1451 = vshrl.u32 %v1450, 7
        %v1452 = vsub.s32 1, %v1451
        %v1453 = vrot.slane %v1444, %v1452
        %v1456 = vmul.f32 %v1442, %v1449
        %v1457 = vmul.f32 %v1443, %v1453
        %1458 = vst [vmem:[#allocation3 + $0x80] sm:$0xff] %v1456
        %1459 = vst [vmem:[#allocation3 + $0x88] sm:$0xff] %v1457
        %v1460 = vld [vmem:[#allocation3] sm:$0xff]
        %v1461 = vld [vmem:[#allocation3 + $0x8] sm:$0xff]
        %v1462 = vld [vmem:[#allocation3 + $0x10] sm:$0xff]
        %v1463 = vld [vmem:[#allocation3 + $0x18] sm:$0xff]
        %v1464 = vld [vmem:[#allocation3 + $0x20] sm:$0xff]
        %v1465 = vld [vmem:[#allocation3 + $0x28] sm:$0xff]
        %v1466 = vld [vmem:[#allocation3 + $0x30] sm:$0xff]
        %v1467 = vld [vmem:[#allocation3 + $0x38] sm:$0xff]
        %v1468 = vld [vmem:[#allocation3 + $0x40] sm:$0xff]
        %v1469 = vld [vmem:[#allocation3 + $0x48] sm:$0xff]
        %v1470 = vld [vmem:[#allocation3 + $0x50] sm:$0xff]
        %v1471 = vld [vmem:[#allocation3 + $0x58] sm:$0xff]
        %v1472 = vld [vmem:[#allocation3 + $0x60] sm:$0xff]
        %v1473 = vld [vmem:[#allocation3 + $0x68] sm:$0xff]
        %v1474 = vld [vmem:[#allocation3 + $0x70] sm:$0xff]
        %v1475 = vld [vmem:[#allocation3 + $0x78] sm:$0xff]
        %v1476 = vld [vmem:[#allocation3 + $0x80] sm:$0xff]
        %v1477 = vld [vmem:[#allocation3 + $0x88] sm:$0xff]
        %v1478 = vpack.c.bf16 %v1462, %v1460
        %v1479 = vpack.c.bf16 %v1463, %v1461
        %v1480 = vpack.c.bf16 %v1466, %v1464
        %v1481 = vpack.c.bf16 %v1467, %v1465
        %v1482 = vpack.c.bf16 %v1470, %v1468
        %v1483 = vpack.c.bf16 %v1471, %v1469
        %v1484 = vpack.c.bf16 %v1474, %v1472
        %v1485 = vpack.c.bf16 %v1475, %v1473
        %v1486 = vpack.c.bf16 %v1476, %v1476
        %v1487 = vpack.c.bf16 %v1477, %v1477
        %v1488 = vld [vmem:[%s10] sm:$0xf]
        %v1489 = vld [vmem:[%s11] sm:$0xff]
        %1491 = vset.pattern.permute.xlu0 0
        %1492 = vperm.xlu0 %1491, %v1489
        %v1493 = vpop.permute.xlu0 %1492
        %v1496 = vsel %vm1011, %v1488, 0
        %v1499 = vsel %vm516, %v1486, 0
        %v1502 = vsel %vm516, %v1487, 0
        %1504 = vmatprep.subr.bf16.mxu0 %v1479
        %1505 = vmatpush1.bf16.msra.mxu0 %v1478
        %1506 = vmatprep.subr.bf16.mxu0 %v1481
        %1507 = vmatpush1.bf16.msra.mxu0 %v1480
        %1508 = vmatprep.subr.bf16.mxu0 %v1483
        %1509 = vmatpush1.bf16.msra.mxu0 %v1482
        %1510 = vmatprep.subr.bf16.mxu0 %v1485
        %1511 = vmatpush1.bf16.msra.mxu0 %v1484
        %1512 = vmatprep.subr.bf16.mxu0 %v1502
        %1513 = vmatpush1.bf16.msra.mxu0 %v1499
        %1514 = vmatprep.subr.bf16.mxu0 0
        %1515 = vmatpush1.bf16.msra.mxu0 0
        %1516 = vmatprep.subr.bf16.mxu0 0
        %1517 = vmatpush1.bf16.msra.mxu0 0
        %1518 = vmatprep.subr.bf16.mxu0 0
        %1519 = vmatpush1.bf16.msra.mxu0 0
        %1520 = vmatprep.subr.bf16.mxu0 0
        %1521 = vmatpush1.bf16.msra.mxu0 0
        %1522 = vmatprep.subr.bf16.mxu0 0
        %1523 = vmatpush1.bf16.msra.mxu0 0
        %1524 = vmatprep.subr.bf16.mxu0 0
        %1525 = vmatpush1.bf16.msra.mxu0 0
        %1526 = vmatprep.subr.bf16.mxu0 0
        %1527 = vmatpush1.bf16.msra.mxu0 0
        %1528 = vmatprep.subr.bf16.mxu0 0
        %1529 = vmatpush1.bf16.msra.mxu0 0
        %1530 = vmatprep.subr.bf16.mxu0 0
        %1531 = vmatpush1.bf16.msra.mxu0 0
        %1532 = vmatprep.subr.bf16.mxu0 0
        %1533 = vmatpush1.bf16.msra.mxu0 0
        %1534 = vmatprep.subr.bf16.mxu0 0
        %1535 = vmatpush1.bf16.msra.mxu0 0
        %1536 = vmatprep.mubr.bf16.mxu0 0
        %1537 = vmatmul.mubr.bf16.gmra.mrb[0].mxu0 %v1496
        %v1538 = vpop.f32.mrb[0].mxu0
        %v1539 = vadd.f32 %v1493, %v1538
        %v1540 = vpop.f32.mrb[0].mxu0
        %v1541 = vadd.f32 %v1493, %v1540
        %v1542 = vpop.f32.mrb[0].mxu0
        %v1543 = vpop.f32.mrb[0].mxu0
        %1544 = vdwg.mxu0
        %v1545 = vld [vmem:[%s12] sm:$0xf]
        %v1546 = vpack.c.bf16 %v511, %v511
        %v1547 = vpack.c.bf16 %v514, %v514
        %v1548 = vld [vmem:[%s13] sm:$0xff]
        %1550 = vset.pattern.permute.xlu0 0
        %1551 = vperm.xlu0 %1550, %v1548
        %v1552 = vpop.permute.xlu0 %1551
        %v1555 = vsel %vm522, %v1545, 0
        %vm1557 = vcmask 1041408
        %v1559 = vsel %vm1557, %v1546, 0
        %v1562 = vsel %vm1557, %v1547, 0
        %1564 = vmatprep.subr.bf16.mxu0 %v1562
        %1565 = vmatpush1.bf16.msra.mxu0 %v1559
        %1566 = vmatprep.subr.bf16.mxu0 0
        %1567 = vmatpush1.bf16.msra.mxu0 0
        %1568 = vmatprep.subr.bf16.mxu0 0
        %1569 = vmatpush1.bf16.msra.mxu0 0
        %1570 = vmatprep.subr.bf16.mxu0 0
        %1571 = vmatpush1.bf16.msra.mxu0 0
        %1572 = vmatprep.subr.bf16.mxu0 0
        %1573 = vmatpush1.bf16.msra.mxu0 0
        %1574 = vmatprep.subr.bf16.mxu0 0
        %1575 = vmatpush1.bf16.msra.mxu0 0
        %1576 = vmatprep.subr.bf16.mxu0 0
        %1577 = vmatpush1.bf16.msra.mxu0 0
        %1578 = vmatprep.subr.bf16.mxu0 0
        %1579 = vmatpush1.bf16.msra.mxu0 0
        %1580 = vmatprep.subr.bf16.mxu0 0
        %1581 = vmatpush1.bf16.msra.mxu0 0
        %1582 = vmatprep.subr.bf16.mxu0 0
        %1583 = vmatpush1.bf16.msra.mxu0 0
        %1584 = vmatprep.subr.bf16.mxu0 0
        %1585 = vmatpush1.bf16.msra.mxu0 0
        %1586 = vmatprep.subr.bf16.mxu0 0
        %1587 = vmatpush1.bf16.msra.mxu0 0
        %1588 = vmatprep.subr.bf16.mxu0 0
        %1589 = vmatpush1.bf16.msra.mxu0 0
        %1590 = vmatprep.subr.bf16.mxu0 0
        %1591 = vmatpush1.bf16.msra.mxu0 0
        %1592 = vmatprep.subr.bf16.mxu0 0
        %1593 = vmatpush1.bf16.msra.mxu0 0
        %1594 = vmatprep.subr.bf16.mxu0 0
        %1595 = vmatpush1.bf16.msra.mxu0 0
        %1596 = vmatprep.mubr.bf16.mxu0 0
        %1597 = vmatmul.mubr.bf16.gmra.mrb[0].mxu0 %v1555
        %v1598 = vpop.f32.mrb[0].mxu0
        %v1599 = vadd.f32 %v1552, %v1598
        %v1600 = vpop.f32.mrb[0].mxu0
        %v1601 = vadd.f32 %v1552, %v1600
        %v1602 = vpop.f32.mrb[0].mxu0
        %v1603 = vpop.f32.mrb[0].mxu0
        %1604 = vdwg.mxu0
        %v1605 = vadd.f32 %v1539, %v1599
        %v1606 = vadd.f32 %v1541, %v1601
        %1607 = vst [vmem:[%s500] sm:$0xff] %v1605
        %1608 = vst [vmem:[%s500 + $0x8] sm:$0xff] %v1606
        %s1609 = sand.u32 %s362, 1
        %s1610 = scalar_lea.sflag [#allocation5], %s1609
        %s1611 = sand.u32 %s362, 1
        %s1612 = smul.addr %s1611, 16
        %s1613 = scalar_lea.vmem [#allocation4], %s1612
        // Predicated region
        $region81: #{tpu_custom_call.1} parent=79 // pred_check
          %p1614 = pneg %p372
        $region82: #{tpu_custom_call.1} parent=79 // pred_check_branch
          %1616 = sbr.rel (%p1614) target = $region84
        $region83: #{tpu_custom_call.1} parent=79 // pred_region
          %s1618 = ssub.s32 256, 256
          %1619 = vsyncadd %s1610, %s1618
          %s1620 = smul.addr %s29, 2
          %s1621 = smul.addr %s1620, 128
          %s1622 = scalar_lea.hbm %s15, %s1621
          %s1624 = sshll.u32 %s1613, 4
          %s1625 = int_to_ptr.vmem [resolvable:$true] %s1624
          %1627 = dma.vmem_to_hbm [thread:$0]  %s1625, 256, %s1622, %s1610
        $region84: #{tpu_custom_call.1} parent=79 // pred_fallthru
          _
      $region80: #{tpu_custom_call.1} parent=5 // pred_fallthru
        _
      %p1628 = scmp.le.s32.totalorder 2, %s24
      // Predicated region
      $region85: #{tpu_custom_call.1} parent=5 // pred_check
        %p1629 = pneg %p1628
      $region86: #{tpu_custom_call.1} parent=5 // pred_check_branch
        %1631 = sbr.rel (%p1629) target = $region88
      $region87: #{tpu_custom_call.1} parent=5 // pred_region
        %s1632 = ssub.s32 %s24, 2
        // Predicated region
        $region89: #{tpu_custom_call.1} parent=87 // pred_check
          %p1633 = pneg %p378
        $region90: #{tpu_custom_call.1} parent=87 // pred_check_branch
          %1635 = sbr.rel (%p1633) target = $region92
        $region91: #{tpu_custom_call.1} parent=87 // pred_region
          %s1636 = sand.u32 %s363, 1
          %s1637 = scalar_lea.sflag [#allocation5], %s1636
          %s1638 = sand.u32 %s363, 1
          %s1639 = smul.addr %s1638, 16
          %s1640 = scalar_lea.vmem [#allocation4], %s1639
          %1641 = dma.done %s1637, 256
        $region92: #{tpu_custom_call.1} parent=87 // pred_fallthru
          _
      $region88: #{tpu_custom_call.1} parent=5 // pred_fallthru
        _
    $region6: #{tpu_custom_call.1} parent=1 // loop_footer
      %s28 = sadd.s32 1, %s24
    $region7: #{tpu_custom_call.1} parent=1 // loop_footer_branch
      %23 = sbr.rel target = $region3
    $region8: #{tpu_custom_call.1} parent=1 // loop_exit
      _
    %1642 = vsyncpa [#allocation5], 1
    %s1643 = scalar_lea.sflag [#allocation5], 1
    %1644 = vsyncpa %s1643, 1

</llo_original>
